<compile_context>
chip_gen: v6e
topology: v6e:2x2x1
jax: 0.10.0
libtpu: 0.0.40
codegen_flags: <defaults>
</compile_context>

<pallas_src>
import functools

import numpy as np
import jax
import jax.numpy as jnp
from jax import lax
from jax.experimental import pallas as pl
from jax.experimental.pallas import tpu as pltpu


def make_tuple(x):
    if isinstance(x, int):
        x = (x, x)
    return x


def _round_up(x, m):
    return ((x + m - 1) // m) * m


def _phys_vmem_bytes(shape, dtype):
    """Physical VMEM bytes of a block: minor dim padded to 128 lanes, second
    minor padded to the sublane granule (8 * (32 bit / itemsize))."""
    itemsize = jnp.dtype(dtype).itemsize
    shape = tuple(shape)
    if len(shape) < 2:
        shape = (1,) + shape
    minor = _round_up(shape[-1], 128)
    granule = 8 * max(1, 4 // itemsize)
    second = _round_up(shape[-2], granule)
    lead = 1
    for s in shape[:-2]:
        lead *= int(s)
    return lead * second * minor * itemsize


# ------------------------------ Pallas kernel ------------------------------ #
def _fused_conv_kernel(x_cur_ref, x_nxt_ref, w_ref, b_ref, o_ref, col_ref, *,
                       taps, tm, cin, halo):
    """One (image, m-tile, cout-tile) grid cell.

    x_cur_ref : (1, tm, Cin)        current window of flat padded activations
    x_nxt_ref : (1, tm, Cin)        next window (supplies the halo rows)
    w_ref     : (KH*KW*Cin, tn)     folded hamming-weight slab
    b_ref     : (1, tn)             bias slice (f32)
    o_ref     : (1, tm, tn)         output tile
    col_ref   : (tm, KH*KW*Cin)     im2col scratch, built once per m-tile
    """
    j = pl.program_id(2)

    # Build the K-folded im2col block once per m-tile and reuse it for every
    # Cout tile (Cout is the innermost, "arbitrary", grid axis).
    @pl.when(j == 0)
    def _build_im2col():
        if halo > 0:
            window = jnp.concatenate(
                [x_cur_ref[0], x_nxt_ref[0, :halo, :]], axis=0)  # (tm+halo, C)
        else:
            window = x_cur_ref[0]
        cols = [lax.slice(window, (off, 0), (off + tm, cin)) for off in taps]
        col_ref[...] = cols[0] if len(cols) == 1 else jnp.concatenate(cols, axis=-1)

    # Single MXU dot with K = KH*KW*Cin (instead of KH*KW small-K dots).
    acc = jnp.dot(col_ref[...], w_ref[...], preferred_element_type=jnp.float32)
    o_ref[0] = (acc + b_ref[...].astype(jnp.float32)).astype(o_ref.dtype)


# ---------------------------- Conv2dHamming module -------------------------- #
class Conv2dHamming:
    def __init__(self, in_channels, out_channels, kernel_size, stride=1,
                 padding=0, dilation=1, groups=1, bias=True, *, key,
                 compute_dtype=jnp.bfloat16):
        kernel_size = make_tuple(kernel_size)
        self.stride = make_tuple(stride)
        self.padding = make_tuple(padding)
        self.dilation = make_tuple(dilation)
        self.groups = groups
        self.in_channels = in_channels
        self.out_channels = out_channels
        self.kernel_size = kernel_size
        # bf16 operands + f32 accumulate: ~2x MXU throughput on v6e/v7x.
        self.compute_dtype = compute_dtype

        # kaiming_normal_(mode='fan_out', nonlinearity='relu')
        fan_out = out_channels * kernel_size[0] * kernel_size[1]
        std = np.sqrt(2.0 / fan_out)
        self.weight = std * jax.random.normal(
            key, (out_channels, in_channels, kernel_size[0], kernel_size[1]),
            dtype=jnp.float32)
        # Matches the PyTorch module: bias parameter is always created (zeros).
        self.bias = jnp.zeros((out_channels,), dtype=jnp.float32)

        hamming2d = np.sqrt(np.outer(np.hamming(kernel_size[0]),
                                     np.hamming(kernel_size[1])))
        self.hamming2d = jnp.asarray(hamming2d, dtype=jnp.float32)

    def transform_weight(self):
        return self.weight * self.hamming2d  # broadcast over (Cout,Cin,KH,KW)

    def __call__(self, x):
        """x: (N, Cin, H, W) float32 NCHW -> (N, Cout, OH, OW) float32."""
        N, C, H, W = x.shape
        if self.groups != 1:
            # TODO(synk): grouped conv would need a per-group weight slab / grid axis.
            raise NotImplementedError("Conv2dHamming Pallas kernel: groups != 1")
        KH, KW = self.kernel_size
        SH, SW = self.stride
        PH, PW = self.padding
        DH, DW = self.dilation
        Cout = self.out_channels

        Hp, Wp = H + 2 * PH, W + 2 * PW
        Wp_a = _round_up(Wp, 8)               # sublane-aligned flat row stride
        OH1 = Hp - DH * (KH - 1)              # stride-1 valid output rows
        OW1 = Wp - DW * (KW - 1)              # stride-1 valid output cols
        assert OH1 > 0 and OW1 > 0, "kernel/dilation larger than padded input"
        OH = (OH1 - 1) // SH + 1
        OW = (OW1 - 1) // SW + 1

        # Each kernel tap is a constant element shift into the flattened
        # (row-major, width = Wp_a) padded activations.
        taps = tuple(kh * DH * Wp_a + kw * DW
                     for kh in range(KH) for kw in range(KW))
        dmax = taps[-1]
        Kc = KH * KW * C

        # Balanced M tiles near 512 flat rows; tile must cover the halo.
        M_need = OH1 * Wp_a
        n_mt = max(1, -(-M_need // 512))
        tm = _round_up(-(-M_need // n_mt), 16)
        halo = _round_up(dmax, 16) if dmax > 0 else 0
        tm = max(tm, halo)
        Mtiles = -(-M_need // tm)
        M_pad = Mtiles * tm
        Lp = (Mtiles + 1) * tm                # +1 tile: source of the halo window

        Cout_p = _round_up(Cout, 128)         # lane-dense output stores
        tn = 256 if Cout_p % 256 == 0 else 128

        # Activations: NCHW -> NHWC, conv padding + width alignment, flatten,
        # then pad the flat axis so block m+1 always exists for the halo window.
        xh = jnp.transpose(x, (0, 2, 3, 1))                        # NHWC
        xp = jnp.pad(xh, ((0, 0), (PH, PH), (PW, PW + (Wp_a - Wp)), (0, 0)))
        xf = xp.reshape(N, Hp * Wp_a, C)
        xf = jnp.pad(xf, ((0, 0), (0, Lp - Hp * Wp_a), (0, 0)))
        xf = xf.astype(self.compute_dtype)

        # Weights: hamming transform, fold taps into the contraction dim.
        # (Cout,Cin,KH,KW) -> (KH,KW,Cin,Cout) -> (KH*KW*Cin, Cout_p)
        w_eff = jnp.transpose(self.transform_weight(), (2, 3, 1, 0))
        w_eff = w_eff.reshape(Kc, Cout)
        w_eff = jnp.pad(w_eff, ((0, 0), (0, Cout_p - Cout)))
        w_eff = w_eff.astype(self.compute_dtype)
        bias = jnp.pad(self.bias, (0, Cout_p - Cout)).reshape(1, Cout_p)
        bias = bias.astype(jnp.float32)

        grid = (N, Mtiles, Cout_p // tn)

        # Lane-padding-aware VMEM estimate (C < 128 still occupies 128 lanes).
        est = (2 * 2 * _phys_vmem_bytes((tm, C), self.compute_dtype)      # x cur/nxt, dbl buf
               + 2 * _phys_vmem_bytes((Kc, tn), self.compute_dtype)       # weights
               + 2 * _phys_vmem_bytes((1, tn), jnp.float32)               # bias
               + 2 * _phys_vmem_bytes((tm, tn), jnp.float32)              # output
               + _phys_vmem_bytes((tm, Kc), self.compute_dtype))          # im2col scratch
        # Always pass a limit (v5e default is only 16 MiB); cap for v7x (64 MiB/TC).
        vmem_limit = int(min(56 * 2**20, max(2 * est, 24 * 2**20)))

        isz = jnp.dtype(self.compute_dtype).itemsize
        flops = 2 * N * M_pad * Kc * Cout_p
        bytes_accessed = (N * Lp * C * isz + Kc * Cout_p * isz
                          + N * M_pad * Cout_p * 4)

        kernel = functools.partial(_fused_conv_kernel, taps=taps, tm=tm,
                                   cin=C, halo=halo)

        out_flat = pl.pallas_call(
            kernel,
            out_shape=jax.ShapeDtypeStruct((N, M_pad, Cout_p), jnp.float32),
            grid_spec=pltpu.PrefetchScalarGridSpec(
                num_scalar_prefetch=0,
                grid=grid,
                in_specs=[
                    # Same array passed twice: current window and next window
                    # (halo) -> activation VMEM use is O(tm), not O(image).
                    pl.BlockSpec((1, tm, C), lambda n, m, j: (n, m, 0)),
                    pl.BlockSpec((1, tm, C), lambda n, m, j: (n, m + 1, 0)),
                    pl.BlockSpec((Kc, tn), lambda n, m, j: (0, j)),
                    pl.BlockSpec((1, tn), lambda n, m, j: (0, j)),
                ],
                out_specs=pl.BlockSpec((1, tm, tn), lambda n, m, j: (n, m, j)),
                scratch_shapes=[pltpu.VMEM((tm, Kc), self.compute_dtype)],
            ),
            compiler_params=pltpu.CompilerParams(
                # Cout axis is innermost and 'arbitrary': the im2col scratch is
                # built at j == 0 and reused across the Cout tiles.
                dimension_semantics=("parallel", "parallel", "arbitrary"),
                vmem_limit_bytes=vmem_limit,
            ),
            cost_estimate=pl.CostEstimate(
                flops=flops, transcendentals=0, bytes_accessed=bytes_accessed),
        )(xf, xf, w_eff, bias)

        # Strip Cout pad / garbage columns, apply stride, back to NCHW.
        out = out_flat[:, :OH1 * Wp_a, :Cout].reshape(N, OH1, Wp_a, Cout)
        out = out[:, ::SH, :OW1:SW, :]
        # TODO(synk): stride > 1 still computes the stride-1 result and
        # subsamples (SH*SW extra work); a per-phase decomposition would avoid it.
        # TODO(synk): keep NHWC / compute-dtype output when the consumer accepts
        # it to skip this slice+transpose epilogue pass.
        return jnp.transpose(out, (0, 3, 1, 2))


# ----------------------------------- main ---------------------------------- #
if __name__ == "__main__":
    key = jax.random.PRNGKey(0)
    k_x, k_w = jax.random.split(key)

    N, Cin, H, W = 2, 4, 16, 16
    Cout, ksize, stride, pad = 8, 3, 1, 1

    x = jax.random.normal(k_x, (N, Cin, H, W), dtype=jnp.float32)

    conv = Conv2dHamming(Cin, Cout, ksize, stride=stride, padding=pad,
                         dilation=1, groups=1, bias=True, key=k_w)

    out = jax.block_until_ready(conv(x))

    # Reference: XLA conv with the same transformed weight, cast to the
    # kernel's compute dtype (bf16 by default) with f32 accumulation.
    cd = conv.compute_dtype
    ref = lax.conv_general_dilated(
        x.astype(cd), conv.transform_weight().astype(cd),
        window_strides=conv.stride,
        padding=[(conv.padding[0], conv.padding[0]),
                 (conv.padding[1], conv.padding[1])],
        rhs_dilation=conv.dilation,
        dimension_numbers=("NCHW", "OIHW", "NCHW"),
        preferred_element_type=jnp.float32,
    ) + conv.bias.reshape(1, Cout, 1, 1)

    assert out.shape == (N, Cout, H, W), out.shape
    if jnp.dtype(cd) == jnp.dtype(jnp.bfloat16):
        tol = 2e-2   # bf16 operands on both sides; only accumulation order differs
    else:
        tol = 1e-4
    np.testing.assert_allclose(np.asarray(out), np.asarray(ref),
                               rtol=tol, atol=tol)
    print("KERNEL_OK")
</pallas_src>

<mosaic_0001>
module attributes {stable_mosaic.version = 11 : i64} {
  func.func @_fused_conv_kernel(%arg0: i32, %arg1: i32, %arg2: i32, %arg3: memref<1x384x4xbf16, #tpu.memory_space<vmem>>, %arg4: memref<1x384x4xbf16, #tpu.memory_space<vmem>>, %arg5: memref<36x128xbf16, #tpu.memory_space<vmem>>, %arg6: memref<1x128xf32, #tpu.memory_space<vmem>>, %arg7: memref<1x384x128xf32, #tpu.memory_space<vmem>>, %arg8: memref<384x36xbf16, #tpu.memory_space<vmem>>) attributes {dimension_semantics = [#tpu.dimension_semantics<parallel>, #tpu.dimension_semantics<parallel>, #tpu.dimension_semantics<arbitrary>], iteration_bounds = array<i64: 2, 1, 1>, scalar_prefetch = 0 : i64, scratch_operands = 1 : i64, tpu.core_type = #tpu.core_type<tc>, window_params = [{transform_indices = @transform_0, window_bounds = array<i64: 1, 384, 4>}, {transform_indices = @transform_1, window_bounds = array<i64: 1, 384, 4>}, {transform_indices = @transform_2, window_bounds = array<i64: 36, 128>}, {transform_indices = @transform_3, window_bounds = array<i64: 1, 128>}, {transform_indices = @transform_4, window_bounds = array<i64: 1, 384, 128>}]} {
    %c0_i32 = arith.constant 0 : i32
    %0 = arith.cmpi eq, %arg2, %c0_i32 : i32
    %1 = arith.extui %0 : i1 to i32
    %c0_i32_0 = arith.constant 0 : i32
    %2 = arith.cmpi ne, %1, %c0_i32_0 : i32
    scf.if %2 {
      %c0_9 = arith.constant 0 : index
      %c0_10 = arith.constant 0 : index
      %c0_11 = arith.constant 0 : index
      %12 = vector.load %arg3[%c0_9, %c0_10, %c0_11] : memref<1x384x4xbf16, #tpu.memory_space<vmem>>, vector<1x384x4xbf16>
      %13 = vector.shape_cast %12 : vector<1x384x4xbf16> to vector<384x4xbf16>
      %c0_12 = arith.constant 0 : index
      %c0_13 = arith.constant 0 : index
      %c0_14 = arith.constant 0 : index
      %14 = vector.load %arg4[%c0_12, %c0_13, %c0_14] : memref<1x384x4xbf16, #tpu.memory_space<vmem>>, vector<1x64x4xbf16>
      %15 = vector.shape_cast %14 : vector<1x64x4xbf16> to vector<64x4xbf16>
      %16 = tpu.concatenate %13, %15 in 0 : vector<384x4xbf16>, vector<64x4xbf16> -> vector<448x4xbf16>
      %17 = vector.extract_strided_slice %16 {offsets = [0, 0], sizes = [384, 4], strides = [1, 1]} : vector<448x4xbf16> to vector<384x4xbf16>
      %18 = vector.extract_strided_slice %16 {offsets = [1, 0], sizes = [384, 4], strides = [1, 1]} : vector<448x4xbf16> to vector<384x4xbf16>
      %19 = vector.extract_strided_slice %16 {offsets = [2, 0], sizes = [384, 4], strides = [1, 1]} : vector<448x4xbf16> to vector<384x4xbf16>
      %20 = vector.extract_strided_slice %16 {offsets = [24, 0], sizes = [384, 4], strides = [1, 1]} : vector<448x4xbf16> to vector<384x4xbf16>
      %21 = vector.extract_strided_slice %16 {offsets = [25, 0], sizes = [384, 4], strides = [1, 1]} : vector<448x4xbf16> to vector<384x4xbf16>
      %22 = vector.extract_strided_slice %16 {offsets = [26, 0], sizes = [384, 4], strides = [1, 1]} : vector<448x4xbf16> to vector<384x4xbf16>
      %23 = vector.extract_strided_slice %16 {offsets = [48, 0], sizes = [384, 4], strides = [1, 1]} : vector<448x4xbf16> to vector<384x4xbf16>
      %24 = vector.extract_strided_slice %16 {offsets = [49, 0], sizes = [384, 4], strides = [1, 1]} : vector<448x4xbf16> to vector<384x4xbf16>
      %25 = vector.extract_strided_slice %16 {offsets = [50, 0], sizes = [384, 4], strides = [1, 1]} : vector<448x4xbf16> to vector<384x4xbf16>
      %26 = tpu.concatenate %17, %18, %19, %20, %21, %22, %23, %24, %25 in 1 : vector<384x4xbf16>, vector<384x4xbf16>, vector<384x4xbf16>, vector<384x4xbf16>, vector<384x4xbf16>, vector<384x4xbf16>, vector<384x4xbf16>, vector<384x4xbf16>, vector<384x4xbf16> -> vector<384x36xbf16>
      %c0_15 = arith.constant 0 : index
      %c0_16 = arith.constant 0 : index
      %27 = vector.load %arg8[%c0_15, %c0_16] : memref<384x36xbf16, #tpu.memory_space<vmem>>, vector<384x36xbf16>
      tpu.vector_store %arg8[%c0_15, %c0_16], %26 {strides = array<i32>} : memref<384x36xbf16, #tpu.memory_space<vmem>>, vector<384x36xbf16>,
    } else {
    }
    %c0 = arith.constant 0 : index
    %c0_1 = arith.constant 0 : index
    %3 = vector.load %arg8[%c0, %c0_1] : memref<384x36xbf16, #tpu.memory_space<vmem>>, vector<384x36xbf16>
    %c0_2 = arith.constant 0 : index
    %c0_3 = arith.constant 0 : index
    %4 = vector.load %arg5[%c0_2, %c0_3] : memref<36x128xbf16, #tpu.memory_space<vmem>>, vector<36x128xbf16>
    %cst = arith.constant dense<0.000000e+00> : vector<384x128xf32>
    %5 = tpu.matmul %3, %4, %cst {dimension_numbers = #tpu.dot_dimension_numbers<[1], [0], [0], [1], [0, 0, 1, 1], [], []>} : vector<384x36xbf16>, vector<36x128xbf16>, vector<384x128xf32> -> vector<384x128xf32>
    %c0_4 = arith.constant 0 : index
    %c0_5 = arith.constant 0 : index
    %6 = vector.load %arg6[%c0_4, %c0_5] : memref<1x128xf32, #tpu.memory_space<vmem>>, vector<1x128xf32>
    %7 = vector.broadcast %6 : vector<1x128xf32> to vector<384x128xf32>
    %8 = arith.addf %5, %7 : vector<384x128xf32>
    %c0_6 = arith.constant 0 : index
    %c0_7 = arith.constant 0 : index
    %c0_8 = arith.constant 0 : index
    %9 = vector.load %arg7[%c0_6, %c0_7, %c0_8] : memref<1x384x128xf32, #tpu.memory_space<vmem>>, vector<1x384x128xf32>
    %10 = vector.shape_cast %9 : vector<1x384x128xf32> to vector<384x128xf32>
    %11 = vector.shape_cast %8 : vector<384x128xf32> to vector<1x384x128xf32>
    tpu.vector_store %arg7[%c0_6, %c0_7, %c0_8], %11 {strides = array<i32>} : memref<1x384x128xf32, #tpu.memory_space<vmem>>, vector<1x384x128xf32>,
    return
  }
  func.func @transform_0(%arg0: i32, %arg1: i32, %arg2: i32) -> (i32, i32, i32) {
    %c0_i32 = arith.constant 0 : i32
    %c0_i32_0 = arith.constant 0 : i32
    return %arg0, %arg1, %c0_i32 : i32, i32, i32
  }
  func.func @transform_1(%arg0: i32, %arg1: i32, %arg2: i32) -> (i32, i32, i32) {
    %c1_i32 = arith.constant 1 : i32
    %0 = arith.addi %arg1, %c1_i32 : i32
    %c0_i32 = arith.constant 0 : i32
    %c0_i32_0 = arith.constant 0 : i32
    return %arg0, %0, %c0_i32 : i32, i32, i32
  }
  func.func @transform_2(%arg0: i32, %arg1: i32, %arg2: i32) -> (i32, i32) {
    %c0_i32 = arith.constant 0 : i32
    %c0_i32_0 = arith.constant 0 : i32
    return %c0_i32, %arg2 : i32, i32
  }
  func.func @transform_3(%arg0: i32, %arg1: i32, %arg2: i32) -> (i32, i32) {
    %c0_i32 = arith.constant 0 : i32
    %c0_i32_0 = arith.constant 0 : i32
    return %c0_i32, %arg2 : i32, i32
  }
  func.func @transform_4(%arg0: i32, %arg1: i32, %arg2: i32) -> (i32, i32, i32) {
    %c0_i32 = arith.constant 0 : i32
    return %arg0, %arg1, %arg2 : i32, i32, i32
  }
}

</mosaic_0001>

<llo_original>
// kernel: tpu_custom_call.1
$region0: #{tpu_custom_call.1}
  #allocation0 [shape = 'u32[]', space=smem, size = 0x4, offset = 0x4, fixed_abs, tag = 'smem constant byte address 0x4 - core index']
  #allocation1 [shape = 'u32[144,128]{1,0:T(1,128)}', space=vmem, size = 0x12000, scoped, tag = 'internal scratch']
  #allocation2 [shape = 'bf16[384,36]{1,0:T(8,128)(2,1)}', space=vmem, size = 0x18000, scoped, tag = 'scratch operand']
  %s0 = inlined_call_operand.vmem [shape: bf16[2,768,4], index: 0, kind: input, shape index: {}]
  %s1 = inlined_call_operand.vmem [shape: bf16[2,768,4], index: 1, kind: input, shape index: {}]
  %s2 = inlined_call_operand.vmem [shape: bf16[36,128], index: 2, kind: input, shape index: {}]
  %s3 = inlined_call_operand.vmem [shape: f32[1,128], index: 3, kind: input, shape index: {}]
  %s4 = inlined_call_operand.hbm [shape: f32[2,384,128], index: 4, kind: output, shape index: {}]
  %s5 = sld [smem:[#allocation0]]
  $region53: #{tpu_custom_call.1} parent=0
    _
  %s7 = ssub.s32 1, %s5
  %s8 = scalar_select 0, %s7, %s5
  $region1: #{tpu_custom_call.1} parent=0
    #allocation3 [shape = 'u8[393216]{0}', space=vmem, size = 0x60000, scoped, tag = 'output window, operand 0']
    #allocation4 [shape = 's32[2]{0}', space=sflag, size = 0x8, scoped, tag = 'scoped memory for tpu_custom_call.1']
    %9 = vsyncpa [#allocation4], 0
    %s10 = scalar_lea.sflag [#allocation4], 1
    %11 = vsyncpa %s10, 0
    loop: start=0, step=1, limit=4
    $region2: #{tpu_custom_call.1} parent=1 // loop_pre_header
      _
    $region3: #{tpu_custom_call.1} parent=1 // loop_header
      %s13 = sphi 0, %s17
      %p14 = scmp.ge.s32.totalorder %s13, 4
      %s20 = sphi 0, %s39
      %s21 = sphi 0, %s35
      %s22 = sphi 0, %s31
      %s23 = sphi 0, %s20
      %s24 = sphi 0, %s21
      %s25 = sphi 0, %s22
      %s26 = sphi 0, %s23
      %s27 = sphi 0, %s24
      %s28 = sphi 0, %s25
      %s44 = sphi 0, %s46
      %s47 = sphi 0, %s44
      %s48 = sphi 0, %s47
      %s64 = sphi 0, %s48
      %s74 = sphi 0, %s76
      %s77 = sphi 0, %s74
      %s78 = sphi 0, %s77
      %s94 = sphi 0, %s78
      %s100 = sphi 0, %s102
      %s103 = sphi 0, %s100
      %s104 = sphi 0, %s103
      %s120 = sphi 0, %s104
      %s126 = sphi 0, %s128
      %s129 = sphi 0, %s126
      %s130 = sphi 0, %s129
      %s146 = sphi 0, %s130
      %s156 = sphi 0, %s158
      %s159 = sphi 0, %s156
      %s160 = sphi 0, %s159
      %s176 = sphi 0, %s160
    $region4: #{tpu_custom_call.1} parent=1 // loop_header_branch
      %16 = sbr.rel (%p14) target = $region8
    $region5: #{tpu_custom_call.1} parent=1 // loop_body
      %s18 = ssub.s32 %s13, 1
      %s19 = ssub.s32 %s13, 2
      %s29 = sadd.s32 1, %s22
      %p30 = scmp.ge.s32.totalorder %s29, 1
      %s31 = scalar_select %p30, 0, %s29
      %s32 = sadd.s32 1, %s21
      %s33 = scalar_select %p30, %s32, %s21
      %p34 = scmp.ge.s32.totalorder %s33, 1
      %s35 = scalar_select %p34, 0, %s33
      %s36 = sadd.s32 1, %s20
      %s37 = scalar_select %p34, %s36, %s20
      %p38 = scmp.ge.s32.totalorder %s37, 2
      %s39 = scalar_select %p38, 0, %s37
      %s40 = ssub.s32 %s20, %s39
      %s41 = ssub.s32 %s21, %s35
      %s42 = sor.u32 %s40, %s41
      %p43 = scmp.eq.s32.totalorder %s42, 0
      %s45 = sadd.s32 %s44, 1
      %s46 = scalar_select %p43, %s44, %s45
      %p49 = pneg %p43
      %p50 = scmp.eq.s32.totalorder %s13, 1
      %p51 = por %p49, %p50
      %p52 = scmp.ne.s32.totalorder %s44, %s47
      %p53 = scmp.eq.s32.totalorder %s13, 0
      %p54 = por %p52, %p53
      %p55 = scmp.ne.s32.totalorder %s44, %s47
      %p56 = scmp.eq.s32.totalorder %s18, 1
      %p57 = por %p55, %p56
      %p58 = scmp.ne.s32.totalorder %s47, %s48
      %p59 = scmp.eq.s32.totalorder %s18, 0
      %p60 = por %p58, %p59
      %p61 = scmp.ne.s32.totalorder %s47, %s48
      %p62 = scmp.eq.s32.totalorder %s19, 1
      %p63 = por %p61, %p62
      %p65 = scmp.ne.s32.totalorder %s48, %s64
      %p66 = scmp.eq.s32.totalorder %s19, 0
      %p67 = por %p65, %p66
      %s68 = sadd.s32 %s21, 1
      %s69 = sadd.s32 %s35, 1
      %s70 = ssub.s32 %s20, %s39
      %s71 = ssub.s32 %s68, %s69
      %s72 = sor.u32 %s70, %s71
      %p73 = scmp.eq.s32.totalorder %s72, 0
      %s75 = sadd.s32 %s74, 1
      %s76 = scalar_select %p73, %s74, %s75
      %p79 = pneg %p73
      %p80 = scmp.eq.s32.totalorder %s13, 1
      %p81 = por %p79, %p80
      %p82 = scmp.ne.s32.totalorder %s74, %s77
      %p83 = scmp.eq.s32.totalorder %s13, 0
      %p84 = por %p82, %p83
      %p85 = scmp.ne.s32.totalorder %s74, %s77
      %p86 = scmp.eq.s32.totalorder %s18, 1
      %p87 = por %p85, %p86
      %p88 = scmp.ne.s32.totalorder %s77, %s78
      %p89 = scmp.eq.s32.totalorder %s18, 0
      %p90 = por %p88, %p89
      %p91 = scmp.ne.s32.totalorder %s77, %s78
      %p92 = scmp.eq.s32.totalorder %s19, 1
      %p93 = por %p91, %p92
      %p95 = scmp.ne.s32.totalorder %s78, %s94
      %p96 = scmp.eq.s32.totalorder %s19, 0
      %p97 = por %p95, %p96
      %s98 = ssub.s32 %s22, %s31
      %p99 = scmp.eq.s32.totalorder %s98, 0
      %s101 = sadd.s32 %s100, 1
      %s102 = scalar_select %p99, %s100, %s101
      %p105 = pneg %p99
      %p106 = scmp.eq.s32.totalorder %s13, 1
      %p107 = por %p105, %p106
      %p108 = scmp.ne.s32.totalorder %s100, %s103
      %p109 = scmp.eq.s32.totalorder %s13, 0
      %p110 = por %p108, %p109
      %p111 = scmp.ne.s32.totalorder %s100, %s103
      %p112 = scmp.eq.s32.totalorder %s18, 1
      %p113 = por %p111, %p112
      %p114 = scmp.ne.s32.totalorder %s103, %s104
      %p115 = scmp.eq.s32.totalorder %s18, 0
      %p116 = por %p114, %p115
      %p117 = scmp.ne.s32.totalorder %s103, %s104
      %p118 = scmp.eq.s32.totalorder %s19, 1
      %p119 = por %p117, %p118
      %p121 = scmp.ne.s32.totalorder %s104, %s120
      %p122 = scmp.eq.s32.totalorder %s19, 0
      %p123 = por %p121, %p122
      %s124 = ssub.s32 %s22, %s31
      %p125 = scmp.eq.s32.totalorder %s124, 0
      %s127 = sadd.s32 %s126, 1
      %s128 = scalar_select %p125, %s126, %s127
      %p131 = pneg %p125
      %p132 = scmp.eq.s32.totalorder %s13, 1
      %p133 = por %p131, %p132
      %p134 = scmp.ne.s32.totalorder %s126, %s129
      %p135 = scmp.eq.s32.totalorder %s13, 0
      %p136 = por %p134, %p135
      %p137 = scmp.ne.s32.totalorder %s126, %s129
      %p138 = scmp.eq.s32.totalorder %s18, 1
      %p139 = por %p137, %p138
      %p140 = scmp.ne.s32.totalorder %s129, %s130
      %p141 = scmp.eq.s32.totalorder %s18, 0
      %p142 = por %p140, %p141
      %p143 = scmp.ne.s32.totalorder %s129, %s130
      %p144 = scmp.eq.s32.totalorder %s19, 1
      %p145 = por %p143, %p144
      %p147 = scmp.ne.s32.totalorder %s130, %s146
      %p148 = scmp.eq.s32.totalorder %s19, 0
      %p149 = por %p147, %p148
      %s150 = ssub.s32 %s20, %s39
      %s151 = ssub.s32 %s21, %s35
      %s152 = sor.u32 %s150, %s151
      %s153 = ssub.s32 %s22, %s31
      %s154 = sor.u32 %s152, %s153
      %p155 = scmp.eq.s32.totalorder %s154, 0
      %s157 = sadd.s32 %s156, 1
      %s158 = scalar_select %p155, %s156, %s157
      %p161 = pneg %p155
      %p162 = scmp.eq.s32.totalorder %s13, 1
      %p163 = por %p161, %p162
      %p164 = scmp.ne.s32.totalorder %s156, %s159
      %p165 = scmp.eq.s32.totalorder %s13, 0
      %p166 = por %p164, %p165
      %p167 = scmp.ne.s32.totalorder %s156, %s159
      %p168 = scmp.eq.s32.totalorder %s18, 1
      %p169 = por %p167, %p168
      %p170 = scmp.ne.s32.totalorder %s159, %s160
      %p171 = scmp.eq.s32.totalorder %s18, 0
      %p172 = por %p170, %p171
      %p173 = scmp.ne.s32.totalorder %s159, %s160
      %p174 = scmp.eq.s32.totalorder %s19, 1
      %p175 = por %p173, %p174
      %p177 = scmp.ne.s32.totalorder %s160, %s176
      %p178 = scmp.eq.s32.totalorder %s19, 0
      %p179 = por %p177, %p178
      %p180 = scmp.le.s32.totalorder 1, %s13
      %p181 = scmp.lt.s32.totalorder %s13, 3
      %p182 = pnand %p180, %p181
      %p183 = pneg %p182
      // Predicated region
      $region9: #{tpu_custom_call.1} parent=5 // pred_check
        _
      $region10: #{tpu_custom_call.1} parent=5 // pred_check_branch
        %185 = sbr.rel (%p182) target = $region12
      $region11: #{tpu_custom_call.1} parent=5 // pred_region
        %s186 = ssub.s32 %s13, 1
        // Predicated region
        $region13: #{tpu_custom_call.1} parent=11 // pred_check
          %p187 = pneg %p116
        $region14: #{tpu_custom_call.1} parent=11 // pred_check_branch
          %189 = sbr.rel (%p187) target = $region16
        $region15: #{tpu_custom_call.1} parent=11 // pred_region
          %p190 = scmp.lt.s32.totalorder %s25, 0
          %s191 = scalar_select %p190, %s25, 0
          %s192 = smul.addr %s191, 4
          %s193 = scalar_lea.vmem %s2, %s192
        $region16: #{tpu_custom_call.1} parent=11 // pred_fallthru
          _
        // Predicated region
        $region17: #{tpu_custom_call.1} parent=11 // pred_check
          %p194 = pneg %p142
        $region18: #{tpu_custom_call.1} parent=11 // pred_check_branch
          %196 = sbr.rel (%p194) target = $region20
        $region19: #{tpu_custom_call.1} parent=11 // pred_region
          %p197 = scmp.lt.s32.totalorder %s25, 0
          %s198 = scalar_select %p197, %s25, 0
          %s199 = scalar_lea.vmem %s3, %s198
        $region20: #{tpu_custom_call.1} parent=11 // pred_fallthru
          _
      $region12: #{tpu_custom_call.1} parent=5 // pred_fallthru
        _
      %p200 = scmp.lt.s32.totalorder %s13, 2
      // Predicated region
      $region21: #{tpu_custom_call.1} parent=5 // pred_check
        %p201 = pneg %p200
      $region22: #{tpu_custom_call.1} parent=5 // pred_check_branch
        %203 = sbr.rel (%p201) target = $region24
      $region23: #{tpu_custom_call.1} parent=5 // pred_region
        // Predicated region
        $region25: #{tpu_custom_call.1} parent=23 // pred_check
          %p204 = pneg %p54
        $region26: #{tpu_custom_call.1} parent=23 // pred_check_branch
          %206 = sbr.rel (%p204) target = $region28
        $region27: #{tpu_custom_call.1} parent=23 // pred_region
          %s207 = smul.u32 48, %s21
          %p208 = scmp.lt.s32.totalorder %s20, 1
          %s209 = scalar_select %p208, %s20, 1
          %p210 = scmp.lt.s32.totalorder %s207, 95
          %s211 = scalar_select %p210, %s207, 95
          %s212 = smul.addr %s209, 96
          %s213 = sadd.s32 %s211, %s212
          %s214 = smul.addr %s213, 4
          %s215 = scalar_lea.vmem %s0, %s214
          %s216 = smul.u32 48, %s21
        $region28: #{tpu_custom_call.1} parent=23 // pred_fallthru
          _
        // Predicated region
        $region29: #{tpu_custom_call.1} parent=23 // pred_check
          %p217 = pneg %p84
        $region30: #{tpu_custom_call.1} parent=23 // pred_check_branch
          %219 = sbr.rel (%p217) target = $region32
        $region31: #{tpu_custom_call.1} parent=23 // pred_region
          %s220 = sadd.s32 %s21, 1
          %s221 = smul.u32 48, %s220
          %p222 = scmp.lt.s32.totalorder %s20, 1
          %s223 = scalar_select %p222, %s20, 1
          %p224 = scmp.lt.s32.totalorder %s221, 95
          %s225 = scalar_select %p224, %s221, 95
          %s226 = smul.addr %s223, 96
          %s227 = sadd.s32 %s225, %s226
          %s228 = smul.addr %s227, 4
          %s229 = scalar_lea.vmem %s1, %s228
          %s230 = sadd.s32 %s21, 1
          %s231 = smul.u32 48, %s230
        $region32: #{tpu_custom_call.1} parent=23 // pred_fallthru
          _
      $region24: #{tpu_custom_call.1} parent=5 // pred_fallthru
        _
      %p232 = scmp.le.s32.totalorder 1, %s13
      %p233 = scmp.lt.s32.totalorder %s13, 3
      %p234 = pnand %p232, %p233
      %p235 = pneg %p234
      // Predicated region
      $region33: #{tpu_custom_call.1} parent=5 // pred_check
        _
      $region34: #{tpu_custom_call.1} parent=5 // pred_check_branch
        %237 = sbr.rel (%p234) target = $region36
      $region35: #{tpu_custom_call.1} parent=5 // pred_region
        %s238 = ssub.s32 %s13, 1
        %s239 = smul.u32 48, %s24
        %p240 = scmp.lt.s32.totalorder %s23, 1
        %s241 = scalar_select %p240, %s23, 1
        %p242 = scmp.lt.s32.totalorder %s239, 95
        %s243 = scalar_select %p242, %s239, 95
        %s244 = smul.addr %s241, 96
        %s245 = sadd.s32 %s243, %s244
        %s246 = smul.addr %s245, 4
        %s247 = scalar_lea.vmem %s0, %s246
        %p248 = pneg %p60
        %p249 = pneg %p57
        %s250 = sadd.s32 %s24, 1
        %s251 = smul.u32 48, %s250
        %p252 = scmp.lt.s32.totalorder %s23, 1
        %s253 = scalar_select %p252, %s23, 1
        %p254 = scmp.lt.s32.totalorder %s251, 95
        %s255 = scalar_select %p254, %s251, 95
        %s256 = smul.addr %s253, 96
        %s257 = sadd.s32 %s255, %s256
        %s258 = smul.addr %s257, 4
        %s259 = scalar_lea.vmem %s1, %s258
        %p260 = pneg %p90
        %p261 = pneg %p87
        %p262 = scmp.lt.s32.totalorder %s25, 0
        %s263 = scalar_select %p262, %s25, 0
        %s264 = smul.addr %s263, 4
        %s265 = scalar_lea.vmem %s2, %s264
        %p266 = pneg %p116
        %p267 = pneg %p113
        %p268 = scmp.lt.s32.totalorder %s25, 0
        %s269 = scalar_select %p268, %s25, 0
        %s270 = scalar_lea.vmem %s3, %s269
        %p271 = pneg %p142
        %p272 = pneg %p139
        %p273 = pneg %p172
        %p274 = pneg %p169
        %s275 = sand.u32 %s159, 1
        %s276 = scalar_lea.sflag [#allocation4], %s275
        %s277 = sand.u32 %s159, 1
        %s278 = smul.addr %s277, 384
        %s279 = scalar_lea.vmem [#allocation3], %s278
        %s280 = smul.u32 48, %s24
        %p281 = scmp.lt.s32.totalorder %s23, 1
        %s282 = scalar_select %p281, %s23, 1
        %p283 = scmp.lt.s32.totalorder %s280, 95
        %s284 = scalar_select %p283, %s280, 95
        %s285 = smul.addr %s282, 96
        %s286 = sadd.s32 %s284, %s285
        %s287 = smul.addr %s286, 4
        %s288 = scalar_lea.vmem %s0, %s287
        %s289 = smul.u32 48, %s24
        %s290 = sadd.s32 %s24, 1
        %s291 = smul.u32 48, %s290
        %p292 = scmp.lt.s32.totalorder %s23, 1
        %s293 = scalar_select %p292, %s23, 1
        %p294 = scmp.lt.s32.totalorder %s291, 95
        %s295 = scalar_select %p294, %s291, 95
        %s296 = smul.addr %s293, 96
        %s297 = sadd.s32 %s295, %s296
        %s298 = smul.addr %s297, 4
        %s299 = scalar_lea.vmem %s1, %s298
        %s300 = sadd.s32 %s24, 1
        %s301 = smul.u32 48, %s300
        %p302 = scmp.lt.s32.totalorder %s25, 0
        %s303 = scalar_select %p302, %s25, 0
        %s304 = smul.addr %s303, 4
        %s305 = scalar_lea.vmem %s2, %s304
        %p306 = scmp.lt.s32.totalorder %s25, 0
        %s307 = scalar_select %p306, %s25, 0
        %s308 = scalar_lea.vmem %s3, %s307
        %s309 = smul.u32 48, %s24
        %p311 = scmp.eq.s32.totalorder %s25, 0
        // Predicated region
        $region37: #{tpu_custom_call.1} parent=35 // pred_check
          %p312 = pneg %p311
        $region38: #{tpu_custom_call.1} parent=35 // pred_check_branch
          %314 = sbr.rel (%p312) target = $region40
        $region39: #{tpu_custom_call.1} parent=35 // pred_region
          %v315 = vld [vmem:[%s288] sm:$0xf]
          %v316 = vld [vmem:[%s288 + $0x4] sm:$0xf]
          %v317 = vld [vmem:[%s288 + $0x8] sm:$0xf]
          %v318 = vld [vmem:[%s288 + $0xc] sm:$0xf]
          %v319 = vld [vmem:[%s288 + $0x10] sm:$0xf]
          %v320 = vld [vmem:[%s288 + $0x14] sm:$0xf]
          %v321 = vld [vmem:[%s288 + $0x18] sm:$0xf]
          %v322 = vld [vmem:[%s288 + $0x1c] sm:$0xf]
          %v323 = vld [vmem:[%s288 + $0x20] sm:$0xf]
          %v324 = vld [vmem:[%s288 + $0x24] sm:$0xf]
          %v325 = vld [vmem:[%s288 + $0x28] sm:$0xf]
          %v326 = vld [vmem:[%s288 + $0x2c] sm:$0xf]
          %v327 = vld [vmem:[%s288 + $0x30] sm:$0xf]
          %v328 = vld [vmem:[%s288 + $0x34] sm:$0xf]
          %v329 = vld [vmem:[%s288 + $0x38] sm:$0xf]
          %v330 = vld [vmem:[%s288 + $0x3c] sm:$0xf]
          %v331 = vld [vmem:[%s288 + $0x40] sm:$0xf]
          %v332 = vld [vmem:[%s288 + $0x44] sm:$0xf]
          %v333 = vld [vmem:[%s288 + $0x48] sm:$0xf]
          %v334 = vld [vmem:[%s288 + $0x4c] sm:$0xf]
          %v335 = vld [vmem:[%s288 + $0x50] sm:$0xf]
          %v336 = vld [vmem:[%s288 + $0x54] sm:$0xf]
          %v337 = vld [vmem:[%s288 + $0x58] sm:$0xf]
          %v338 = vld [vmem:[%s288 + $0x5c] sm:$0xf]
          %v339 = vld [vmem:[%s288 + $0x60] sm:$0xf]
          %v340 = vld [vmem:[%s288 + $0x64] sm:$0xf]
          %v341 = vld [vmem:[%s288 + $0x68] sm:$0xf]
          %v342 = vld [vmem:[%s288 + $0x6c] sm:$0xf]
          %v343 = vld [vmem:[%s288 + $0x70] sm:$0xf]
          %v344 = vld [vmem:[%s288 + $0x74] sm:$0xf]
          %v345 = vld [vmem:[%s288 + $0x78] sm:$0xf]
          %v346 = vld [vmem:[%s288 + $0x7c] sm:$0xf]
          %v347 = vld [vmem:[%s288 + $0x80] sm:$0xf]
          %v348 = vld [vmem:[%s288 + $0x84] sm:$0xf]
          %v349 = vld [vmem:[%s288 + $0x88] sm:$0xf]
          %v350 = vld [vmem:[%s288 + $0x8c] sm:$0xf]
          %v351 = vld [vmem:[%s288 + $0x90] sm:$0xf]
          %v352 = vld [vmem:[%s288 + $0x94] sm:$0xf]
          %v353 = vld [vmem:[%s288 + $0x98] sm:$0xf]
          %v354 = vld [vmem:[%s288 + $0x9c] sm:$0xf]
          %v355 = vld [vmem:[%s288 + $0xa0] sm:$0xf]
          %v356 = vld [vmem:[%s288 + $0xa4] sm:$0xf]
          %v357 = vld [vmem:[%s288 + $0xa8] sm:$0xf]
          %v358 = vld [vmem:[%s288 + $0xac] sm:$0xf]
          %v359 = vld [vmem:[%s288 + $0xb0] sm:$0xf]
          %v360 = vld [vmem:[%s288 + $0xb4] sm:$0xf]
          %v361 = vld [vmem:[%s288 + $0xb8] sm:$0xf]
          %v362 = vld [vmem:[%s288 + $0xbc] sm:$0xf]
          %v363 = vld [vmem:[%s299] sm:$0xf]
          %v364 = vld [vmem:[%s299 + $0x4] sm:$0xf]
          %v365 = vld [vmem:[%s299 + $0x8] sm:$0xf]
          %v366 = vld [vmem:[%s299 + $0xc] sm:$0xf]
          %v367 = vld [vmem:[%s299 + $0x10] sm:$0xf]
          %v368 = vld [vmem:[%s299 + $0x14] sm:$0xf]
          %v369 = vld [vmem:[%s299 + $0x18] sm:$0xf]
          %v370 = vld [vmem:[%s299 + $0x1c] sm:$0xf]
          %v419 = vunpack.c.l.b16 %v315
          %v420 = vunpack.c.l.b16 %v316
          %v421 = vunpack.c.l.b16 %v317
          %v422 = vunpack.c.l.b16 %v318
          %v423 = vunpack.c.l.b16 %v319
          %v424 = vunpack.c.l.b16 %v320
          %v425 = vunpack.c.l.b16 %v321
          %v426 = vunpack.c.l.b16 %v322
          %v427 = vunpack.c.l.b16 %v323
          %v428 = vunpack.c.l.b16 %v324
          %v429 = vunpack.c.l.b16 %v325
          %v430 = vunpack.c.l.b16 %v326
          %v431 = vunpack.c.l.b16 %v327
          %v432 = vunpack.c.l.b16 %v328
          %v433 = vunpack.c.l.b16 %v329
          %v434 = vunpack.c.l.b16 %v330
          %v435 = vunpack.c.l.b16 %v331
          %v436 = vunpack.c.l.b16 %v332
          %v437 = vunpack.c.l.b16 %v333
          %v438 = vunpack.c.l.b16 %v334
          %v439 = vunpack.c.l.b16 %v335
          %v440 = vunpack.c.l.b16 %v336
          %v441 = vunpack.c.l.b16 %v337
          %v442 = vunpack.c.l.b16 %v338
          %v443 = vunpack.c.l.b16 %v339
          %v444 = vunpack.c.l.b16 %v340
          %v445 = vunpack.c.l.b16 %v341
          %v446 = vunpack.c.l.b16 %v342
          %v447 = vunpack.c.l.b16 %v343
          %v448 = vunpack.c.l.b16 %v344
          %v449 = vunpack.c.l.b16 %v345
          %v450 = vunpack.c.l.b16 %v346
          %v451 = vunpack.c.l.b16 %v347
          %v452 = vunpack.c.l.b16 %v348
          %v453 = vunpack.c.l.b16 %v349
          %v454 = vunpack.c.l.b16 %v350
          %v455 = vunpack.c.l.b16 %v351
          %v456 = vunpack.c.l.b16 %v352
          %v457 = vunpack.c.l.b16 %v353
          %v458 = vunpack.c.l.b16 %v354
          %v459 = vunpack.c.l.b16 %v355
          %v460 = vunpack.c.l.b16 %v356
          %v461 = vunpack.c.l.b16 %v357
          %v462 = vunpack.c.l.b16 %v358
          %v463 = vunpack.c.l.b16 %v359
          %v464 = vunpack.c.l.b16 %v360
          %v465 = vunpack.c.l.b16 %v361
          %v466 = vunpack.c.l.b16 %v362
          %v467 = vpack.c.b16 %v420, %v419
          %v468 = vpack.c.b16 %v422, %v421
          %v469 = vpack.c.b16 %v424, %v423
          %v470 = vpack.c.b16 %v426, %v425
          %v471 = vpack.c.b16 %v428, %v427
          %v472 = vpack.c.b16 %v430, %v429
          %v473 = vpack.c.b16 %v432, %v431
          %v474 = vpack.c.b16 %v434, %v433
          %v475 = vpack.c.b16 %v436, %v435
          %v476 = vpack.c.b16 %v438, %v437
          %v477 = vpack.c.b16 %v440, %v439
          %v478 = vpack.c.b16 %v442, %v441
          %v479 = vpack.c.b16 %v444, %v443
          %v480 = vpack.c.b16 %v446, %v445
          %v481 = vpack.c.b16 %v448, %v447
          %v482 = vpack.c.b16 %v450, %v449
          %v483 = vpack.c.b16 %v452, %v451
          %v484 = vpack.c.b16 %v454, %v453
          %v485 = vpack.c.b16 %v456, %v455
          %v486 = vpack.c.b16 %v458, %v457
          %v487 = vpack.c.b16 %v460, %v459
          %v488 = vpack.c.b16 %v462, %v461
          %v489 = vpack.c.b16 %v464, %v463
          %v490 = vpack.c.b16 %v466, %v465
          %v499 = vunpack.c.l.b16 %v363
          %v500 = vunpack.c.l.b16 %v364
          %v501 = vunpack.c.l.b16 %v365
          %v502 = vunpack.c.l.b16 %v366
          %v503 = vunpack.c.l.b16 %v367
          %v504 = vunpack.c.l.b16 %v368
          %v505 = vunpack.c.l.b16 %v369
          %v506 = vunpack.c.l.b16 %v370
          %v507 = vpack.c.b16 %v500, %v499
          %v508 = vpack.c.b16 %v502, %v501
          %v509 = vpack.c.b16 %v504, %v503
          %v510 = vpack.c.b16 %v506, %v505
          %vm511 = vsmask.f32 7424
          %v513 = vshrl.u32 %v467, 16
          %v515 = vshll.u32 %v467, 16
          %v517 = vrot.slane %v515, 1
          %v518 = vor.u32 %v513, %v517
          %v520 = vshll.u32 %v468, 16
          %v522 = vrot.slane %v520, 1
          %v523 = vsel %vm511, %v518, %v522
          %v524 = vshrl.u32 %v468, 16
          %v526 = vor.u32 %v524, %v522
          %v528 = vshll.u32 %v469, 16
          %v530 = vrot.slane %v528, 1
          %v531 = vsel %vm511, %v526, %v530
          %v532 = vshrl.u32 %v469, 16
          %v534 = vor.u32 %v532, %v530
          %v536 = vshll.u32 %v470, 16
          %v538 = vrot.slane %v536, 1
          %v539 = vsel %vm511, %v534, %v538
          %v540 = vshrl.u32 %v470, 16
          %v542 = vor.u32 %v540, %v538
          %v544 = vshll.u32 %v471, 16
          %v546 = vrot.slane %v544, 1
          %v547 = vsel %vm511, %v542, %v546
          %v548 = vshrl.u32 %v471, 16
          %v550 = vor.u32 %v548, %v546
          %v552 = vshll.u32 %v472, 16
          %v554 = vrot.slane %v552, 1
          %v555 = vsel %vm511, %v550, %v554
          %v556 = vshrl.u32 %v472, 16
          %v558 = vor.u32 %v556, %v554
          %v560 = vshll.u32 %v473, 16
          %v562 = vrot.slane %v560, 1
          %v563 = vsel %vm511, %v558, %v562
          %v564 = vshrl.u32 %v473, 16
          %v566 = vor.u32 %v564, %v562
          %v568 = vshll.u32 %v474, 16
          %v570 = vrot.slane %v568, 1
          %v571 = vsel %vm511, %v566, %v570
          %v572 = vshrl.u32 %v474, 16
          %v574 = vor.u32 %v572, %v570
          %v576 = vshll.u32 %v475, 16
          %v578 = vrot.slane %v576, 1
          %v579 = vsel %vm511, %v574, %v578
          %v580 = vshrl.u32 %v475, 16
          %v582 = vor.u32 %v580, %v578
          %v584 = vshll.u32 %v476, 16
          %v586 = vrot.slane %v584, 1
          %v587 = vsel %vm511, %v582, %v586
          %v588 = vshrl.u32 %v476, 16
          %v590 = vor.u32 %v588, %v586
          %v592 = vshll.u32 %v477, 16
          %v594 = vrot.slane %v592, 1
          %v595 = vsel %vm511, %v590, %v594
          %v596 = vshrl.u32 %v477, 16
          %v598 = vor.u32 %v596, %v594
          %v600 = vshll.u32 %v478, 16
          %v602 = vrot.slane %v600, 1
          %v603 = vsel %vm511, %v598, %v602
          %v604 = vshrl.u32 %v478, 16
          %v606 = vor.u32 %v604, %v602
          %v608 = vshll.u32 %v479, 16
          %v610 = vrot.slane %v608, 1
          %v611 = vsel %vm511, %v606, %v610
          %v612 = vshrl.u32 %v479, 16
          %v614 = vor.u32 %v612, %v610
          %v616 = vshll.u32 %v480, 16
          %v618 = vrot.slane %v616, 1
          %v619 = vsel %vm511, %v614, %v618
          %v620 = vshrl.u32 %v480, 16
          %v622 = vor.u32 %v620, %v618
          %v624 = vshll.u32 %v481, 16
          %v626 = vrot.slane %v624, 1
          %v627 = vsel %vm511, %v622, %v626
          %v628 = vshrl.u32 %v481, 16
          %v630 = vor.u32 %v628, %v626
          %v632 = vshll.u32 %v482, 16
          %v634 = vrot.slane %v632, 1
          %v635 = vsel %vm511, %v630, %v634
          %v636 = vshrl.u32 %v482, 16
          %v638 = vor.u32 %v636, %v634
          %v640 = vshll.u32 %v483, 16
          %v642 = vrot.slane %v640, 1
          %v643 = vsel %vm511, %v638, %v642
          %v644 = vshrl.u32 %v483, 16
          %v646 = vor.u32 %v644, %v642
          %v648 = vshll.u32 %v484, 16
          %v650 = vrot.slane %v648, 1
          %v651 = vsel %vm511, %v646, %v650
          %v652 = vshrl.u32 %v484, 16
          %v654 = vor.u32 %v652, %v650
          %v656 = vshll.u32 %v485, 16
          %v658 = vrot.slane %v656, 1
          %v659 = vsel %vm511, %v654, %v658
          %v660 = vshrl.u32 %v485, 16
          %v662 = vor.u32 %v660, %v658
          %v664 = vshll.u32 %v486, 16
          %v666 = vrot.slane %v664, 1
          %v667 = vsel %vm511, %v662, %v666
          %v668 = vshrl.u32 %v486, 16
          %v670 = vor.u32 %v668, %v666
          %v672 = vshll.u32 %v487, 16
          %v674 = vrot.slane %v672, 1
          %v675 = vsel %vm511, %v670, %v674
          %v676 = vshrl.u32 %v487, 16
          %v678 = vor.u32 %v676, %v674
          %v680 = vshll.u32 %v488, 16
          %v682 = vrot.slane %v680, 1
          %v683 = vsel %vm511, %v678, %v682
          %v684 = vshrl.u32 %v488, 16
          %v686 = vor.u32 %v684, %v682
          %v688 = vshll.u32 %v489, 16
          %v690 = vrot.slane %v688, 1
          %v691 = vsel %vm511, %v686, %v690
          %v692 = vshrl.u32 %v489, 16
          %v694 = vor.u32 %v692, %v690
          %v696 = vshll.u32 %v490, 16
          %v698 = vrot.slane %v696, 1
          %v699 = vsel %vm511, %v694, %v698
          %v700 = vshrl.u32 %v490, 16
          %v702 = vor.u32 %v700, %v698
          %v704 = vshll.u32 %v507, 16
          %v706 = vrot.slane %v704, 1
          %v707 = vsel %vm511, %v702, %v706
          %708 = vrot.lane.b32.xlu0 %v523, 4
          %v709 = vpop.permute.xlu0 %708
          %710 = vrot.lane.b32.xlu0 %v531, 4
          %v711 = vpop.permute.xlu0 %710
          %712 = vrot.lane.b32.xlu0 %v539, 4
          %v713 = vpop.permute.xlu0 %712
          %714 = vrot.lane.b32.xlu0 %v547, 4
          %v715 = vpop.permute.xlu0 %714
          %716 = vrot.lane.b32.xlu0 %v555, 4
          %v717 = vpop.permute.xlu0 %716
          %718 = vrot.lane.b32.xlu0 %v563, 4
          %v719 = vpop.permute.xlu0 %718
          %720 = vrot.lane.b32.xlu0 %v571, 4
          %v721 = vpop.permute.xlu0 %720
          %722 = vrot.lane.b32.xlu0 %v579, 4
          %v723 = vpop.permute.xlu0 %722
          %724 = vrot.lane.b32.xlu0 %v587, 4
          %v725 = vpop.permute.xlu0 %724
          %726 = vrot.lane.b32.xlu0 %v595, 4
          %v727 = vpop.permute.xlu0 %726
          %728 = vrot.lane.b32.xlu0 %v603, 4
          %v729 = vpop.permute.xlu0 %728
          %730 = vrot.lane.b32.xlu0 %v611, 4
          %v731 = vpop.permute.xlu0 %730
          %732 = vrot.lane.b32.xlu0 %v619, 4
          %v733 = vpop.permute.xlu0 %732
          %734 = vrot.lane.b32.xlu0 %v627, 4
          %v735 = vpop.permute.xlu0 %734
          %736 = vrot.lane.b32.xlu0 %v635, 4
          %v737 = vpop.permute.xlu0 %736
          %738 = vrot.lane.b32.xlu0 %v643, 4
          %v739 = vpop.permute.xlu0 %738
          %740 = vrot.lane.b32.xlu0 %v651, 4
          %v741 = vpop.permute.xlu0 %740
          %742 = vrot.lane.b32.xlu0 %v659, 4
          %v743 = vpop.permute.xlu0 %742
          %744 = vrot.lane.b32.xlu0 %v667, 4
          %v745 = vpop.permute.xlu0 %744
          %746 = vrot.lane.b32.xlu0 %v675, 4
          %v747 = vpop.permute.xlu0 %746
          %748 = vrot.lane.b32.xlu0 %v683, 4
          %v749 = vpop.permute.xlu0 %748
          %750 = vrot.lane.b32.xlu0 %v691, 4
          %v751 = vpop.permute.xlu0 %750
          %752 = vrot.lane.b32.xlu0 %v699, 4
          %v753 = vpop.permute.xlu0 %752
          %754 = vrot.lane.b32.xlu0 %v707, 4
          %v755 = vpop.permute.xlu0 %754
          %vm756 = vcmask 1046528
          %v757 = vrot.slane %v467, 1
          %v758 = vrot.slane %v468, 1
          %v759 = vsel %vm756, %v757, %v758
          %v760 = vrot.slane %v469, 1
          %v761 = vsel %vm756, %v758, %v760
          %v762 = vrot.slane %v470, 1
          %v763 = vsel %vm756, %v760, %v762
          %v764 = vrot.slane %v471, 1
          %v765 = vsel %vm756, %v762, %v764
          %v766 = vrot.slane %v472, 1
          %v767 = vsel %vm756, %v764, %v766
          %v768 = vrot.slane %v473, 1
          %v769 = vsel %vm756, %v766, %v768
          %v770 = vrot.slane %v474, 1
          %v771 = vsel %vm756, %v768, %v770
          %v772 = vrot.slane %v475, 1
          %v773 = vsel %vm756, %v770, %v772
          %v774 = vrot.slane %v476, 1
          %v775 = vsel %vm756, %v772, %v774
          %v776 = vrot.slane %v477, 1
          %v777 = vsel %vm756, %v774, %v776
          %v778 = vrot.slane %v478, 1
          %v779 = vsel %vm756, %v776, %v778
          %v780 = vrot.slane %v479, 1
          %v781 = vsel %vm756, %v778, %v780
          %v782 = vrot.slane %v480, 1
          %v783 = vsel %vm756, %v780, %v782
          %v784 = vrot.slane %v481, 1
          %v785 = vsel %vm756, %v782, %v784
          %v786 = vrot.slane %v482, 1
          %v787 = vsel %vm756, %v784, %v786
          %v788 = vrot.slane %v483, 1
          %v789 = vsel %vm756, %v786, %v788
          %v790 = vrot.slane %v484, 1
          %v791 = vsel %vm756, %v788, %v790
          %v792 = vrot.slane %v485, 1
          %v793 = vsel %vm756, %v790, %v792
          %v794 = vrot.slane %v486, 1
          %v795 = vsel %vm756, %v792, %v794
          %v796 = vrot.slane %v487, 1
          %v797 = vsel %vm756, %v794, %v796
          %v798 = vrot.slane %v488, 1
          %v799 = vsel %vm756, %v796, %v798
          %v800 = vrot.slane %v489, 1
          %v801 = vsel %vm756, %v798, %v800
          %v802 = vrot.slane %v490, 1
          %v803 = vsel %vm756, %v800, %v802
          %v804 = vrot.slane %v507, 1
          %v805 = vsel %vm756, %v802, %v804
          %806 = vrot.lane.b32.xlu0 %v759, 8
          %v807 = vpop.permute.xlu0 %806
          %808 = vrot.lane.b32.xlu0 %v761, 8
          %v809 = vpop.permute.xlu0 %808
          %810 = vrot.lane.b32.xlu0 %v763, 8
          %v811 = vpop.permute.xlu0 %810
          %812 = vrot.lane.b32.xlu0 %v765, 8
          %v813 = vpop.permute.xlu0 %812
          %814 = vrot.lane.b32.xlu0 %v767, 8
          %v815 = vpop.permute.xlu0 %814
          %816 = vrot.lane.b32.xlu0 %v769, 8
          %v817 = vpop.permute.xlu0 %816
          %818 = vrot.lane.b32.xlu0 %v771, 8
          %v819 = vpop.permute.xlu0 %818
          %820 = vrot.lane.b32.xlu0 %v773, 8
          %v821 = vpop.permute.xlu0 %820
          %822 = vrot.lane.b32.xlu0 %v775, 8
          %v823 = vpop.permute.xlu0 %822
          %824 = vrot.lane.b32.xlu0 %v777, 8
          %v825 = vpop.permute.xlu0 %824
          %826 = vrot.lane.b32.xlu0 %v779, 8
          %v827 = vpop.permute.xlu0 %826
          %828 = vrot.lane.b32.xlu0 %v781, 8
          %v829 = vpop.permute.xlu0 %828
          %830 = vrot.lane.b32.xlu0 %v783, 8
          %v831 = vpop.permute.xlu0 %830
          %832 = vrot.lane.b32.xlu0 %v785, 8
          %v833 = vpop.permute.xlu0 %832
          %834 = vrot.lane.b32.xlu0 %v787, 8
          %v835 = vpop.permute.xlu0 %834
          %836 = vrot.lane.b32.xlu0 %v789, 8
          %v837 = vpop.permute.xlu0 %836
          %838 = vrot.lane.b32.xlu0 %v791, 8
          %v839 = vpop.permute.xlu0 %838
          %840 = vrot.lane.b32.xlu0 %v793, 8
          %v841 = vpop.permute.xlu0 %840
          %842 = vrot.lane.b32.xlu0 %v795, 8
          %v843 = vpop.permute.xlu0 %842
          %844 = vrot.lane.b32.xlu0 %v797, 8
          %v845 = vpop.permute.xlu0 %844
          %846 = vrot.lane.b32.xlu0 %v799, 8
          %v847 = vpop.permute.xlu0 %846
          %848 = vrot.lane.b32.xlu0 %v801, 8
          %v849 = vpop.permute.xlu0 %848
          %850 = vrot.lane.b32.xlu0 %v803, 8
          %v851 = vpop.permute.xlu0 %850
          %852 = vrot.lane.b32.xlu0 %v805, 8
          %v853 = vpop.permute.xlu0 %852
          %vm854 = vcmask 1043456
          %v855 = vrot.slane %v468, 4
          %v856 = vrot.slane %v469, 4
          %v857 = vsel %vm854, %v855, %v856
          %v858 = vrot.slane %v470, 4
          %v859 = vsel %vm854, %v856, %v858
          %v860 = vrot.slane %v471, 4
          %v861 = vsel %vm854, %v858, %v860
          %v862 = vrot.slane %v472, 4
          %v863 = vsel %vm854, %v860, %v862
          %v864 = vrot.slane %v473, 4
          %v865 = vsel %vm854, %v862, %v864
          %v866 = vrot.slane %v474, 4
          %v867 = vsel %vm854, %v864, %v866
          %v868 = vrot.slane %v475, 4
          %v869 = vsel %vm854, %v866, %v868
          %v870 = vrot.slane %v476, 4
          %v871 = vsel %vm854, %v868, %v870
          %v872 = vrot.slane %v477, 4
          %v873 = vsel %vm854, %v870, %v872
          %v874 = vrot.slane %v478, 4
          %v875 = vsel %vm854, %v872, %v874
          %v876 = vrot.slane %v479, 4
          %v877 = vsel %vm854, %v874, %v876
          %v878 = vrot.slane %v480, 4
          %v879 = vsel %vm854, %v876, %v878
          %v880 = vrot.slane %v481, 4
          %v881 = vsel %vm854, %v878, %v880
          %v882 = vrot.slane %v482, 4
          %v883 = vsel %vm854, %v880, %v882
          %v884 = vrot.slane %v483, 4
          %v885 = vsel %vm854, %v882, %v884
          %v886 = vrot.slane %v484, 4
          %v887 = vsel %vm854, %v884, %v886
          %v888 = vrot.slane %v485, 4
          %v889 = vsel %vm854, %v886, %v888
          %v890 = vrot.slane %v486, 4
          %v891 = vsel %vm854, %v888, %v890
          %v892 = vrot.slane %v487, 4
          %v893 = vsel %vm854, %v890, %v892
          %v894 = vrot.slane %v488, 4
          %v895 = vsel %vm854, %v892, %v894
          %v896 = vrot.slane %v489, 4
          %v897 = vsel %vm854, %v894, %v896
          %v898 = vrot.slane %v490, 4
          %v899 = vsel %vm854, %v896, %v898
          %v900 = vrot.slane %v507, 4
          %v901 = vsel %vm854, %v898, %v900
          %v902 = vrot.slane %v508, 4
          %v903 = vsel %vm854, %v900, %v902
          %904 = vrot.lane.b32.xlu0 %v857, 12
          %v905 = vpop.permute.xlu0 %904
          %906 = vrot.lane.b32.xlu0 %v859, 12
          %v907 = vpop.permute.xlu0 %906
          %908 = vrot.lane.b32.xlu0 %v861, 12
          %v909 = vpop.permute.xlu0 %908
          %910 = vrot.lane.b32.xlu0 %v863, 12
          %v911 = vpop.permute.xlu0 %910
          %912 = vrot.lane.b32.xlu0 %v865, 12
          %v913 = vpop.permute.xlu0 %912
          %914 = vrot.lane.b32.xlu0 %v867, 12
          %v915 = vpop.permute.xlu0 %914
          %916 = vrot.lane.b32.xlu0 %v869, 12
          %v917 = vpop.permute.xlu0 %916
          %918 = vrot.lane.b32.xlu0 %v871, 12
          %v919 = vpop.permute.xlu0 %918
          %920 = vrot.lane.b32.xlu0 %v873, 12
          %v921 = vpop.permute.xlu0 %920
          %922 = vrot.lane.b32.xlu0 %v875, 12
          %v923 = vpop.permute.xlu0 %922
          %924 = vrot.lane.b32.xlu0 %v877, 12
          %v925 = vpop.permute.xlu0 %924
          %926 = vrot.lane.b32.xlu0 %v879, 12
          %v927 = vpop.permute.xlu0 %926
          %928 = vrot.lane.b32.xlu0 %v881, 12
          %v929 = vpop.permute.xlu0 %928
          %930 = vrot.lane.b32.xlu0 %v883, 12
          %v931 = vpop.permute.xlu0 %930
          %932 = vrot.lane.b32.xlu0 %v885, 12
          %v933 = vpop.permute.xlu0 %932
          %934 = vrot.lane.b32.xlu0 %v887, 12
          %v935 = vpop.permute.xlu0 %934
          %936 = vrot.lane.b32.xlu0 %v889, 12
          %v937 = vpop.permute.xlu0 %936
          %938 = vrot.lane.b32.xlu0 %v891, 12
          %v939 = vpop.permute.xlu0 %938
          %940 = vrot.lane.b32.xlu0 %v893, 12
          %v941 = vpop.permute.xlu0 %940
          %942 = vrot.lane.b32.xlu0 %v895, 12
          %v943 = vpop.permute.xlu0 %942
          %944 = vrot.lane.b32.xlu0 %v897, 12
          %v945 = vpop.permute.xlu0 %944
          %946 = vrot.lane.b32.xlu0 %v899, 12
          %v947 = vpop.permute.xlu0 %946
          %948 = vrot.lane.b32.xlu0 %v901, 12
          %v949 = vpop.permute.xlu0 %948
          %950 = vrot.lane.b32.xlu0 %v903, 12
          %v951 = vpop.permute.xlu0 %950
          %vm952 = vsmask.f32 3328
          %v953 = vrot.slane %v524, 4
          %v954 = vrot.slane %v520, 5
          %v955 = vor.u32 %v953, %v954
          %v956 = vrot.slane %v532, 4
          %v957 = vrot.slane %v528, 5
          %v958 = vor.u32 %v956, %v957
          %v959 = vsel %vm952, %v955, %v958
          %v960 = vrot.slane %v540, 4
          %v961 = vrot.slane %v536, 5
          %v962 = vor.u32 %v960, %v961
          %v963 = vsel %vm952, %v958, %v962
          %v964 = vrot.slane %v548, 4
          %v965 = vrot.slane %v544, 5
          %v966 = vor.u32 %v964, %v965
          %v967 = vsel %vm952, %v962, %v966
          %v968 = vrot.slane %v556, 4
          %v969 = vrot.slane %v552, 5
          %v970 = vor.u32 %v968, %v969
          %v971 = vsel %vm952, %v966, %v970
          %v972 = vrot.slane %v564, 4
          %v973 = vrot.slane %v560, 5
          %v974 = vor.u32 %v972, %v973
          %v975 = vsel %vm952, %v970, %v974
          %v976 = vrot.slane %v572, 4
          %v977 = vrot.slane %v568, 5
          %v978 = vor.u32 %v976, %v977
          %v979 = vsel %vm952, %v974, %v978
          %v980 = vrot.slane %v580, 4
          %v981 = vrot.slane %v576, 5
          %v982 = vor.u32 %v980, %v981
          %v983 = vsel %vm952, %v978, %v982
          %v984 = vrot.slane %v588, 4
          %v985 = vrot.slane %v584, 5
          %v986 = vor.u32 %v984, %v985
          %v987 = vsel %vm952, %v982, %v986
          %v988 = vrot.slane %v596, 4
          %v989 = vrot.slane %v592, 5
          %v990 = vor.u32 %v988, %v989
          %v991 = vsel %vm952, %v986, %v990
          %v992 = vrot.slane %v604, 4
          %v993 = vrot.slane %v600, 5
          %v994 = vor.u32 %v992, %v993
          %v995 = vsel %vm952, %v990, %v994
          %v996 = vrot.slane %v612, 4
          %v997 = vrot.slane %v608, 5
          %v998 = vor.u32 %v996, %v997
          %v999 = vsel %vm952, %v994, %v998
          %v1000 = vrot.slane %v620, 4
          %v1001 = vrot.slane %v616, 5
          %v1002 = vor.u32 %v1000, %v1001
          %v1003 = vsel %vm952, %v998, %v1002
          %v1004 = vrot.slane %v628, 4
          %v1005 = vrot.slane %v624, 5
          %v1006 = vor.u32 %v1004, %v1005
          %v1007 = vsel %vm952, %v1002, %v1006
          %v1008 = vrot.slane %v636, 4
          %v1009 = vrot.slane %v632, 5
          %v1010 = vor.u32 %v1008, %v1009
          %v1011 = vsel %vm952, %v1006, %v1010
          %v1012 = vrot.slane %v644, 4
          %v1013 = vrot.slane %v640, 5
          %v1014 = vor.u32 %v1012, %v1013
          %v1015 = vsel %vm952, %v1010, %v1014
          %v1016 = vrot.slane %v652, 4
          %v1017 = vrot.slane %v648, 5
          %v1018 = vor.u32 %v1016, %v1017
          %v1019 = vsel %vm952, %v1014, %v1018
          %v1020 = vrot.slane %v660, 4
          %v1021 = vrot.slane %v656, 5
          %v1022 = vor.u32 %v1020, %v1021
          %v1023 = vsel %vm952, %v1018, %v1022
          %v1024 = vrot.slane %v668, 4
          %v1025 = vrot.slane %v664, 5
          %v1026 = vor.u32 %v1024, %v1025
          %v1027 = vsel %vm952, %v1022, %v1026
          %v1028 = vrot.slane %v676, 4
          %v1029 = vrot.slane %v672, 5
          %v1030 = vor.u32 %v1028, %v1029
          %v1031 = vsel %vm952, %v1026, %v1030
          %v1032 = vrot.slane %v684, 4
          %v1033 = vrot.slane %v680, 5
          %v1034 = vor.u32 %v1032, %v1033
          %v1035 = vsel %vm952, %v1030, %v1034
          %v1036 = vrot.slane %v692, 4
          %v1037 = vrot.slane %v688, 5
          %v1038 = vor.u32 %v1036, %v1037
          %v1039 = vsel %vm952, %v1034, %v1038
          %v1040 = vrot.slane %v700, 4
          %v1041 = vrot.slane %v696, 5
          %v1042 = vor.u32 %v1040, %v1041
          %v1043 = vsel %vm952, %v1038, %v1042
          %v1044 = vshrl.u32 %v507, 16
          %v1046 = vrot.slane %v1044, 4
          %v1047 = vrot.slane %v704, 5
          %v1048 = vor.u32 %v1046, %v1047
          %v1049 = vsel %vm952, %v1042, %v1048
          %v1051 = vshrl.u32 %v508, 16
          %v1053 = vrot.slane %v1051, 4
          %v1054 = vshll.u32 %v508, 16
          %v1056 = vrot.slane %v1054, 5
          %v1057 = vor.u32 %v1053, %v1056
          %v1058 = vsel %vm952, %v1048, %v1057
          %1059 = vrot.lane.b32.xlu0 %v959, 16
          %v1060 = vpop.permute.xlu0 %1059
          %1061 = vrot.lane.b32.xlu0 %v963, 16
          %v1062 = vpop.permute.xlu0 %1061
          %1063 = vrot.lane.b32.xlu0 %v967, 16
          %v1064 = vpop.permute.xlu0 %1063
          %1065 = vrot.lane.b32.xlu0 %v971, 16
          %v1066 = vpop.permute.xlu0 %1065
          %1067 = vrot.lane.b32.xlu0 %v975, 16
          %v1068 = vpop.permute.xlu0 %1067
          %1069 = vrot.lane.b32.xlu0 %v979, 16
          %v1070 = vpop.permute.xlu0 %1069
          %1071 = vrot.lane.b32.xlu0 %v983, 16
          %v1072 = vpop.permute.xlu0 %1071
          %1073 = vrot.lane.b32.xlu0 %v987, 16
          %v1074 = vpop.permute.xlu0 %1073
          %1075 = vrot.lane.b32.xlu0 %v991, 16
          %v1076 = vpop.permute.xlu0 %1075
          %1077 = vrot.lane.b32.xlu0 %v995, 16
          %v1078 = vpop.permute.xlu0 %1077
          %1079 = vrot.lane.b32.xlu0 %v999, 16
          %v1080 = vpop.permute.xlu0 %1079
          %1081 = vrot.lane.b32.xlu0 %v1003, 16
          %v1082 = vpop.permute.xlu0 %1081
          %1083 = vrot.lane.b32.xlu0 %v1007, 16
          %v1084 = vpop.permute.xlu0 %1083
          %1085 = vrot.lane.b32.xlu0 %v1011, 16
          %v1086 = vpop.permute.xlu0 %1085
          %1087 = vrot.lane.b32.xlu0 %v1015, 16
          %v1088 = vpop.permute.xlu0 %1087
          %1089 = vrot.lane.b32.xlu0 %v1019, 16
          %v1090 = vpop.permute.xlu0 %1089
          %1091 = vrot.lane.b32.xlu0 %v1023, 16
          %v1092 = vpop.permute.xlu0 %1091
          %1093 = vrot.lane.b32.xlu0 %v1027, 16
          %v1094 = vpop.permute.xlu0 %1093
          %1095 = vrot.lane.b32.xlu0 %v1031, 16
          %v1096 = vpop.permute.xlu0 %1095
          %1097 = vrot.lane.b32.xlu0 %v1035, 16
          %v1098 = vpop.permute.xlu0 %1097
          %1099 = vrot.lane.b32.xlu0 %v1039, 16
          %v1100 = vpop.permute.xlu0 %1099
          %1101 = vrot.lane.b32.xlu0 %v1043, 16
          %v1102 = vpop.permute.xlu0 %1101
          %1103 = vrot.lane.b32.xlu0 %v1049, 16
          %v1104 = vpop.permute.xlu0 %1103
          %1105 = vrot.lane.b32.xlu0 %v1058, 16
          %v1106 = vpop.permute.xlu0 %1105
          %vm1107 = vcmask 1042432
          %v1108 = vrot.slane %v468, 5
          %v1109 = vrot.slane %v469, 5
          %v1110 = vsel %vm1107, %v1108, %v1109
          %v1111 = vrot.slane %v470, 5
          %v1112 = vsel %vm1107, %v1109, %v1111
          %v1113 = vrot.slane %v471, 5
          %v1114 = vsel %vm1107, %v1111, %v1113
          %v1115 = vrot.slane %v472, 5
          %v1116 = vsel %vm1107, %v1113, %v1115
          %v1117 = vrot.slane %v473, 5
          %v1118 = vsel %vm1107, %v1115, %v1117
          %v1119 = vrot.slane %v474, 5
          %v1120 = vsel %vm1107, %v1117, %v1119
          %v1121 = vrot.slane %v475, 5
          %v1122 = vsel %vm1107, %v1119, %v1121
          %v1123 = vrot.slane %v476, 5
          %v1124 = vsel %vm1107, %v1121, %v1123
          %v1125 = vrot.slane %v477, 5
          %v1126 = vsel %vm1107, %v1123, %v1125
          %v1127 = vrot.slane %v478, 5
          %v1128 = vsel %vm1107, %v1125, %v1127
          %v1129 = vrot.slane %v479, 5
          %v1130 = vsel %vm1107, %v1127, %v1129
          %v1131 = vrot.slane %v480, 5
          %v1132 = vsel %vm1107, %v1129, %v1131
          %v1133 = vrot.slane %v481, 5
          %v1134 = vsel %vm1107, %v1131, %v1133
          %v1135 = vrot.slane %v482, 5
          %v1136 = vsel %vm1107, %v1133, %v1135
          %v1137 = vrot.slane %v483, 5
          %v1138 = vsel %vm1107, %v1135, %v1137
          %v1139 = vrot.slane %v484, 5
          %v1140 = vsel %vm1107, %v1137, %v1139
          %v1141 = vrot.slane %v485, 5
          %v1142 = vsel %vm1107, %v1139, %v1141
          %v1143 = vrot.slane %v486, 5
          %v1144 = vsel %vm1107, %v1141, %v1143
          %v1145 = vrot.slane %v487, 5
          %v1146 = vsel %vm1107, %v1143, %v1145
          %v1147 = vrot.slane %v488, 5
          %v1148 = vsel %vm1107, %v1145, %v1147
          %v1149 = vrot.slane %v489, 5
          %v1150 = vsel %vm1107, %v1147, %v1149
          %v1151 = vrot.slane %v490, 5
          %v1152 = vsel %vm1107, %v1149, %v1151
          %v1153 = vrot.slane %v507, 5
          %v1154 = vsel %vm1107, %v1151, %v1153
          %v1155 = vrot.slane %v508, 5
          %v1156 = vsel %vm1107, %v1153, %v1155
          %1157 = vrot.lane.b32.xlu0 %v1110, 20
          %v1158 = vpop.permute.xlu0 %1157
          %1159 = vrot.lane.b32.xlu0 %v1112, 20
          %v1160 = vpop.permute.xlu0 %1159
          %1161 = vrot.lane.b32.xlu0 %v1114, 20
          %v1162 = vpop.permute.xlu0 %1161
          %1163 = vrot.lane.b32.xlu0 %v1116, 20
          %v1164 = vpop.permute.xlu0 %1163
          %1165 = vrot.lane.b32.xlu0 %v1118, 20
          %v1166 = vpop.permute.xlu0 %1165
          %1167 = vrot.lane.b32.xlu0 %v1120, 20
          %v1168 = vpop.permute.xlu0 %1167
          %1169 = vrot.lane.b32.xlu0 %v1122, 20
          %v1170 = vpop.permute.xlu0 %1169
          %1171 = vrot.lane.b32.xlu0 %v1124, 20
          %v1172 = vpop.permute.xlu0 %1171
          %1173 = vrot.lane.b32.xlu0 %v1126, 20
          %v1174 = vpop.permute.xlu0 %1173
          %1175 = vrot.lane.b32.xlu0 %v1128, 20
          %v1176 = vpop.permute.xlu0 %1175
          %1177 = vrot.lane.b32.xlu0 %v1130, 20
          %v1178 = vpop.permute.xlu0 %1177
          %1179 = vrot.lane.b32.xlu0 %v1132, 20
          %v1180 = vpop.permute.xlu0 %1179
          %1181 = vrot.lane.b32.xlu0 %v1134, 20
          %v1182 = vpop.permute.xlu0 %1181
          %1183 = vrot.lane.b32.xlu0 %v1136, 20
          %v1184 = vpop.permute.xlu0 %1183
          %1185 = vrot.lane.b32.xlu0 %v1138, 20
          %v1186 = vpop.permute.xlu0 %1185
          %1187 = vrot.lane.b32.xlu0 %v1140, 20
          %v1188 = vpop.permute.xlu0 %1187
          %1189 = vrot.lane.b32.xlu0 %v1142, 20
          %v1190 = vpop.permute.xlu0 %1189
          %1191 = vrot.lane.b32.xlu0 %v1144, 20
          %v1192 = vpop.permute.xlu0 %1191
          %1193 = vrot.lane.b32.xlu0 %v1146, 20
          %v1194 = vpop.permute.xlu0 %1193
          %1195 = vrot.lane.b32.xlu0 %v1148, 20
          %v1196 = vpop.permute.xlu0 %1195
          %1197 = vrot.lane.b32.xlu0 %v1150, 20
          %v1198 = vpop.permute.xlu0 %1197
          %1199 = vrot.lane.b32.xlu0 %v1152, 20
          %v1200 = vpop.permute.xlu0 %1199
          %1201 = vrot.lane.b32.xlu0 %v1154, 20
          %v1202 = vpop.permute.xlu0 %1201
          %1203 = vrot.lane.b32.xlu0 %v1156, 20
          %v1204 = vpop.permute.xlu0 %1203
          %1205 = vrot.lane.b32.xlu0 %v470, 24
          %v1206 = vpop.permute.xlu0 %1205
          %1207 = vrot.lane.b32.xlu0 %v471, 24
          %v1208 = vpop.permute.xlu0 %1207
          %1209 = vrot.lane.b32.xlu0 %v472, 24
          %v1210 = vpop.permute.xlu0 %1209
          %1211 = vrot.lane.b32.xlu0 %v473, 24
          %v1212 = vpop.permute.xlu0 %1211
          %1213 = vrot.lane.b32.xlu0 %v474, 24
          %v1214 = vpop.permute.xlu0 %1213
          %1215 = vrot.lane.b32.xlu0 %v475, 24
          %v1216 = vpop.permute.xlu0 %1215
          %1217 = vrot.lane.b32.xlu0 %v476, 24
          %v1218 = vpop.permute.xlu0 %1217
          %1219 = vrot.lane.b32.xlu0 %v477, 24
          %v1220 = vpop.permute.xlu0 %1219
          %1221 = vrot.lane.b32.xlu0 %v478, 24
          %v1222 = vpop.permute.xlu0 %1221
          %1223 = vrot.lane.b32.xlu0 %v479, 24
          %v1224 = vpop.permute.xlu0 %1223
          %1225 = vrot.lane.b32.xlu0 %v480, 24
          %v1226 = vpop.permute.xlu0 %1225
          %1227 = vrot.lane.b32.xlu0 %v481, 24
          %v1228 = vpop.permute.xlu0 %1227
          %1229 = vrot.lane.b32.xlu0 %v482, 24
          %v1230 = vpop.permute.xlu0 %1229
          %1231 = vrot.lane.b32.xlu0 %v483, 24
          %v1232 = vpop.permute.xlu0 %1231
          %1233 = vrot.lane.b32.xlu0 %v484, 24
          %v1234 = vpop.permute.xlu0 %1233
          %1235 = vrot.lane.b32.xlu0 %v485, 24
          %v1236 = vpop.permute.xlu0 %1235
          %1237 = vrot.lane.b32.xlu0 %v486, 24
          %v1238 = vpop.permute.xlu0 %1237
          %1239 = vrot.lane.b32.xlu0 %v487, 24
          %v1240 = vpop.permute.xlu0 %1239
          %1241 = vrot.lane.b32.xlu0 %v488, 24
          %v1242 = vpop.permute.xlu0 %1241
          %1243 = vrot.lane.b32.xlu0 %v489, 24
          %v1244 = vpop.permute.xlu0 %1243
          %1245 = vrot.lane.b32.xlu0 %v490, 24
          %v1246 = vpop.permute.xlu0 %1245
          %1247 = vrot.lane.b32.xlu0 %v507, 24
          %v1248 = vpop.permute.xlu0 %1247
          %1249 = vrot.lane.b32.xlu0 %v508, 24
          %v1250 = vpop.permute.xlu0 %1249
          %1251 = vrot.lane.b32.xlu0 %v509, 24
          %v1252 = vpop.permute.xlu0 %1251
          %v1253 = vor.u32 %v1044, %v706
          %v1254 = vrot.slane %v1054, 1
          %v1255 = vsel %vm511, %v1253, %v1254
          %v1256 = vor.u32 %v1051, %v1254
          %v1258 = vshll.u32 %v509, 16
          %v1260 = vrot.slane %v1258, 1
          %v1261 = vsel %vm511, %v1256, %v1260
          %v1262 = vshrl.u32 %v509, 16
          %v1264 = vor.u32 %v1262, %v1260
          %v1266 = vshll.u32 %v510, 16
          %v1268 = vrot.slane %v1266, 1
          %v1269 = vsel %vm511, %v1264, %v1268
          %1270 = vrot.lane.b32.xlu0 %v547, 28
          %v1271 = vpop.permute.xlu0 %1270
          %1272 = vrot.lane.b32.xlu0 %v555, 28
          %v1273 = vpop.permute.xlu0 %1272
          %1274 = vrot.lane.b32.xlu0 %v563, 28
          %v1275 = vpop.permute.xlu0 %1274
          %1276 = vrot.lane.b32.xlu0 %v571, 28
          %v1277 = vpop.permute.xlu0 %1276
          %1278 = vrot.lane.b32.xlu0 %v579, 28
          %v1279 = vpop.permute.xlu0 %1278
          %1280 = vrot.lane.b32.xlu0 %v587, 28
          %v1281 = vpop.permute.xlu0 %1280
          %1282 = vrot.lane.b32.xlu0 %v595, 28
          %v1283 = vpop.permute.xlu0 %1282
          %1284 = vrot.lane.b32.xlu0 %v603, 28
          %v1285 = vpop.permute.xlu0 %1284
          %1286 = vrot.lane.b32.xlu0 %v611, 28
          %v1287 = vpop.permute.xlu0 %1286
          %1288 = vrot.lane.b32.xlu0 %v619, 28
          %v1289 = vpop.permute.xlu0 %1288
          %1290 = vrot.lane.b32.xlu0 %v627, 28
          %v1291 = vpop.permute.xlu0 %1290
          %1292 = vrot.lane.b32.xlu0 %v635, 28
          %v1293 = vpop.permute.xlu0 %1292
          %1294 = vrot.lane.b32.xlu0 %v643, 28
          %v1295 = vpop.permute.xlu0 %1294
          %1296 = vrot.lane.b32.xlu0 %v651, 28
          %v1297 = vpop.permute.xlu0 %1296
          %1298 = vrot.lane.b32.xlu0 %v659, 28
          %v1299 = vpop.permute.xlu0 %1298
          %1300 = vrot.lane.b32.xlu0 %v667, 28
          %v1301 = vpop.permute.xlu0 %1300
          %1302 = vrot.lane.b32.xlu0 %v675, 28
          %v1303 = vpop.permute.xlu0 %1302
          %1304 = vrot.lane.b32.xlu0 %v683, 28
          %v1305 = vpop.permute.xlu0 %1304
          %1306 = vrot.lane.b32.xlu0 %v691, 28
          %v1307 = vpop.permute.xlu0 %1306
          %1308 = vrot.lane.b32.xlu0 %v699, 28
          %v1309 = vpop.permute.xlu0 %1308
          %1310 = vrot.lane.b32.xlu0 %v707, 28
          %v1311 = vpop.permute.xlu0 %1310
          %1312 = vrot.lane.b32.xlu0 %v1255, 28
          %v1313 = vpop.permute.xlu0 %1312
          %1314 = vrot.lane.b32.xlu0 %v1261, 28
          %v1315 = vpop.permute.xlu0 %1314
          %1316 = vrot.lane.b32.xlu0 %v1269, 28
          %v1317 = vpop.permute.xlu0 %1316
          %v1318 = vrot.slane %v508, 1
          %v1319 = vsel %vm756, %v804, %v1318
          %v1320 = vrot.slane %v509, 1
          %v1321 = vsel %vm756, %v1318, %v1320
          %v1322 = vrot.slane %v510, 1
          %v1323 = vsel %vm756, %v1320, %v1322
          %1324 = vrot.lane.b32.xlu0 %v765, 32
          %v1325 = vpop.permute.xlu0 %1324
          %1326 = vrot.lane.b32.xlu0 %v767, 32
          %v1327 = vpop.permute.xlu0 %1326
          %1328 = vrot.lane.b32.xlu0 %v769, 32
          %v1329 = vpop.permute.xlu0 %1328
          %1330 = vrot.lane.b32.xlu0 %v771, 32
          %v1331 = vpop.permute.xlu0 %1330
          %1332 = vrot.lane.b32.xlu0 %v773, 32
          %v1333 = vpop.permute.xlu0 %1332
          %1334 = vrot.lane.b32.xlu0 %v775, 32
          %v1335 = vpop.permute.xlu0 %1334
          %1336 = vrot.lane.b32.xlu0 %v777, 32
          %v1337 = vpop.permute.xlu0 %1336
          %1338 = vrot.lane.b32.xlu0 %v779, 32
          %v1339 = vpop.permute.xlu0 %1338
          %1340 = vrot.lane.b32.xlu0 %v781, 32
          %v1341 = vpop.permute.xlu0 %1340
          %1342 = vrot.lane.b32.xlu0 %v783, 32
          %v1343 = vpop.permute.xlu0 %1342
          %1344 = vrot.lane.b32.xlu0 %v785, 32
          %v1345 = vpop.permute.xlu0 %1344
          %1346 = vrot.lane.b32.xlu0 %v787, 32
          %v1347 = vpop.permute.xlu0 %1346
          %1348 = vrot.lane.b32.xlu0 %v789, 32
          %v1349 = vpop.permute.xlu0 %1348
          %1350 = vrot.lane.b32.xlu0 %v791, 32
          %v1351 = vpop.permute.xlu0 %1350
          %1352 = vrot.lane.b32.xlu0 %v793, 32
          %v1353 = vpop.permute.xlu0 %1352
          %1354 = vrot.lane.b32.xlu0 %v795, 32
          %v1355 = vpop.permute.xlu0 %1354
          %1356 = vrot.lane.b32.xlu0 %v797, 32
          %v1357 = vpop.permute.xlu0 %1356
          %1358 = vrot.lane.b32.xlu0 %v799, 32
          %v1359 = vpop.permute.xlu0 %1358
          %1360 = vrot.lane.b32.xlu0 %v801, 32
          %v1361 = vpop.permute.xlu0 %1360
          %1362 = vrot.lane.b32.xlu0 %v803, 32
          %v1363 = vpop.permute.xlu0 %1362
          %1364 = vrot.lane.b32.xlu0 %v805, 32
          %v1365 = vpop.permute.xlu0 %1364
          %1366 = vrot.lane.b32.xlu0 %v1319, 32
          %v1367 = vpop.permute.xlu0 %1366
          %1368 = vrot.lane.b32.xlu0 %v1321, 32
          %v1369 = vpop.permute.xlu0 %1368
          %1370 = vrot.lane.b32.xlu0 %v1323, 32
          %v1371 = vpop.permute.xlu0 %1370
          %vm1372 = vcmask 31744
          %v1374 = vsel %vm1372, %v467, %v709
          %v1376 = vsel %vm1372, %v468, %v711
          %v1378 = vsel %vm1372, %v469, %v713
          %v1380 = vsel %vm1372, %v470, %v715
          %v1382 = vsel %vm1372, %v471, %v717
          %v1384 = vsel %vm1372, %v472, %v719
          %v1386 = vsel %vm1372, %v473, %v721
          %v1388 = vsel %vm1372, %v474, %v723
          %v1390 = vsel %vm1372, %v475, %v725
          %v1392 = vsel %vm1372, %v476, %v727
          %v1394 = vsel %vm1372, %v477, %v729
          %v1396 = vsel %vm1372, %v478, %v731
          %v1398 = vsel %vm1372, %v479, %v733
          %v1400 = vsel %vm1372, %v480, %v735
          %v1402 = vsel %vm1372, %v481, %v737
          %v1404 = vsel %vm1372, %v482, %v739
          %v1406 = vsel %vm1372, %v483, %v741
          %v1408 = vsel %vm1372, %v484, %v743
          %v1410 = vsel %vm1372, %v485, %v745
          %v1412 = vsel %vm1372, %v486, %v747
          %v1414 = vsel %vm1372, %v487, %v749
          %v1416 = vsel %vm1372, %v488, %v751
          %v1418 = vsel %vm1372, %v489, %v753
          %v1420 = vsel %vm1372, %v490, %v755
          %vm1421 = vcmask 64512
          %v1423 = vsel %vm1421, %v1374, %v807
          %v1425 = vsel %vm1421, %v1376, %v809
          %v1427 = vsel %vm1421, %v1378, %v811
          %v1429 = vsel %vm1421, %v1380, %v813
          %v1431 = vsel %vm1421, %v1382, %v815
          %v1433 = vsel %vm1421, %v1384, %v817
          %v1435 = vsel %vm1421, %v1386, %v819
          %v1437 = vsel %vm1421, %v1388, %v821
          %v1439 = vsel %vm1421, %v1390, %v823
          %v1441 = vsel %vm1421, %v1392, %v825
          %v1443 = vsel %vm1421, %v1394, %v827
          %v1445 = vsel %vm1421, %v1396, %v829
          %v1447 = vsel %vm1421, %v1398, %v831
          %v1449 = vsel %vm1421, %v1400, %v833
          %v1451 = vsel %vm1421, %v1402, %v835
          %v1453 = vsel %vm1421, %v1404, %v837
          %v1455 = vsel %vm1421, %v1406, %v839
          %v1457 = vsel %vm1421, %v1408, %v841
          %v1459 = vsel %vm1421, %v1410, %v843
          %v1461 = vsel %vm1421, %v1412, %v845
          %v1463 = vsel %vm1421, %v1414, %v847
          %v1465 = vsel %vm1421, %v1416, %v849
          %v1467 = vsel %vm1421, %v1418, %v851
          %v1469 = vsel %vm1421, %v1420, %v853
          %vm1470 = vcmask 97280
          %v1472 = vsel %vm1470, %v1423, %v905
          %v1474 = vsel %vm1470, %v1425, %v907
          %v1476 = vsel %vm1470, %v1427, %v909
          %v1478 = vsel %vm1470, %v1429, %v911
          %v1480 = vsel %vm1470, %v1431, %v913
          %v1482 = vsel %vm1470, %v1433, %v915
          %v1484 = vsel %vm1470, %v1435, %v917
          %v1486 = vsel %vm1470, %v1437, %v919
          %v1488 = vsel %vm1470, %v1439, %v921
          %v1490 = vsel %vm1470, %v1441, %v923
          %v1492 = vsel %vm1470, %v1443, %v925
          %v1494 = vsel %vm1470, %v1445, %v927
          %v1496 = vsel %vm1470, %v1447, %v929
          %v1498 = vsel %vm1470, %v1449, %v931
          %v1500 = vsel %vm1470, %v1451, %v933
          %v1502 = vsel %vm1470, %v1453, %v935
          %v1504 = vsel %vm1470, %v1455, %v937
          %v1506 = vsel %vm1470, %v1457, %v939
          %v1508 = vsel %vm1470, %v1459, %v941
          %v1510 = vsel %vm1470, %v1461, %v943
          %v1512 = vsel %vm1470, %v1463, %v945
          %v1514 = vsel %vm1470, %v1465, %v947
          %v1516 = vsel %vm1470, %v1467, %v949
          %v1518 = vsel %vm1470, %v1469, %v951
          %vm1519 = vcmask 130048
          %v1521 = vsel %vm1519, %v1472, %v1060
          %v1523 = vsel %vm1519, %v1474, %v1062
          %v1525 = vsel %vm1519, %v1476, %v1064
          %v1527 = vsel %vm1519, %v1478, %v1066
          %v1529 = vsel %vm1519, %v1480, %v1068
          %v1531 = vsel %vm1519, %v1482, %v1070
          %v1533 = vsel %vm1519, %v1484, %v1072
          %v1535 = vsel %vm1519, %v1486, %v1074
          %v1537 = vsel %vm1519, %v1488, %v1076
          %v1539 = vsel %vm1519, %v1490, %v1078
          %v1541 = vsel %vm1519, %v1492, %v1080
          %v1543 = vsel %vm1519, %v1494, %v1082
          %v1545 = vsel %vm1519, %v1496, %v1084
          %v1547 = vsel %vm1519, %v1498, %v1086
          %v1549 = vsel %vm1519, %v1500, %v1088
          %v1551 = vsel %vm1519, %v1502, %v1090
          %v1553 = vsel %vm1519, %v1504, %v1092
          %v1555 = vsel %vm1519, %v1506, %v1094
          %v1557 = vsel %vm1519, %v1508, %v1096
          %v1559 = vsel %vm1519, %v1510, %v1098
          %v1561 = vsel %vm1519, %v1512, %v1100
          %v1563 = vsel %vm1519, %v1514, %v1102
          %v1565 = vsel %vm1519, %v1516, %v1104
          %v1567 = vsel %vm1519, %v1518, %v1106
          %vm1568 = vcmask 162816
          %v1570 = vsel %vm1568, %v1521, %v1158
          %v1572 = vsel %vm1568, %v1523, %v1160
          %v1574 = vsel %vm1568, %v1525, %v1162
          %v1576 = vsel %vm1568, %v1527, %v1164
          %v1578 = vsel %vm1568, %v1529, %v1166
          %v1580 = vsel %vm1568, %v1531, %v1168
          %v1582 = vsel %vm1568, %v1533, %v1170
          %v1584 = vsel %vm1568, %v1535, %v1172
          %v1586 = vsel %vm1568, %v1537, %v1174
          %v1588 = vsel %vm1568, %v1539, %v1176
          %v1590 = vsel %vm1568, %v1541, %v1178
          %v1592 = vsel %vm1568, %v1543, %v1180
          %v1594 = vsel %vm1568, %v1545, %v1182
          %v1596 = vsel %vm1568, %v1547, %v1184
          %v1598 = vsel %vm1568, %v1549, %v1186
          %v1600 = vsel %vm1568, %v1551, %v1188
          %v1602 = vsel %vm1568, %v1553, %v1190
          %v1604 = vsel %vm1568, %v1555, %v1192
          %v1606 = vsel %vm1568, %v1557, %v1194
          %v1608 = vsel %vm1568, %v1559, %v1196
          %v1610 = vsel %vm1568, %v1561, %v1198
          %v1612 = vsel %vm1568, %v1563, %v1200
          %v1614 = vsel %vm1568, %v1565, %v1202
          %v1616 = vsel %vm1568, %v1567, %v1204
          %vm1617 = vcmask 195584
          %v1619 = vsel %vm1617, %v1570, %v1206
          %v1621 = vsel %vm1617, %v1572, %v1208
          %v1623 = vsel %vm1617, %v1574, %v1210
          %v1625 = vsel %vm1617, %v1576, %v1212
          %v1627 = vsel %vm1617, %v1578, %v1214
          %v1629 = vsel %vm1617, %v1580, %v1216
          %v1631 = vsel %vm1617, %v1582, %v1218
          %v1633 = vsel %vm1617, %v1584, %v1220
          %v1635 = vsel %vm1617, %v1586, %v1222
          %v1637 = vsel %vm1617, %v1588, %v1224
          %v1639 = vsel %vm1617, %v1590, %v1226
          %v1641 = vsel %vm1617, %v1592, %v1228
          %v1643 = vsel %vm1617, %v1594, %v1230
          %v1645 = vsel %vm1617, %v1596, %v1232
          %v1647 = vsel %vm1617, %v1598, %v1234
          %v1649 = vsel %vm1617, %v1600, %v1236
          %v1651 = vsel %vm1617, %v1602, %v1238
          %v1653 = vsel %vm1617, %v1604, %v1240
          %v1655 = vsel %vm1617, %v1606, %v1242
          %v1657 = vsel %vm1617, %v1608, %v1244
          %v1659 = vsel %vm1617, %v1610, %v1246
          %v1661 = vsel %vm1617, %v1612, %v1248
          %v1663 = vsel %vm1617, %v1614, %v1250
          %v1665 = vsel %vm1617, %v1616, %v1252
          %vm1666 = vcmask 228352
          %v1668 = vsel %vm1666, %v1619, %v1271
          %v1670 = vsel %vm1666, %v1621, %v1273
          %v1672 = vsel %vm1666, %v1623, %v1275
          %v1674 = vsel %vm1666, %v1625, %v1277
          %v1676 = vsel %vm1666, %v1627, %v1279
          %v1678 = vsel %vm1666, %v1629, %v1281
          %v1680 = vsel %vm1666, %v1631, %v1283
          %v1682 = vsel %vm1666, %v1633, %v1285
          %v1684 = vsel %vm1666, %v1635, %v1287
          %v1686 = vsel %vm1666, %v1637, %v1289
          %v1688 = vsel %vm1666, %v1639, %v1291
          %v1690 = vsel %vm1666, %v1641, %v1293
          %v1692 = vsel %vm1666, %v1643, %v1295
          %v1694 = vsel %vm1666, %v1645, %v1297
          %v1696 = vsel %vm1666, %v1647, %v1299
          %v1698 = vsel %vm1666, %v1649, %v1301
          %v1700 = vsel %vm1666, %v1651, %v1303
          %v1702 = vsel %vm1666, %v1653, %v1305
          %v1704 = vsel %vm1666, %v1655, %v1307
          %v1706 = vsel %vm1666, %v1657, %v1309
          %v1708 = vsel %vm1666, %v1659, %v1311
          %v1710 = vsel %vm1666, %v1661, %v1313
          %v1712 = vsel %vm1666, %v1663, %v1315
          %v1714 = vsel %vm1666, %v1665, %v1317
          %vm1715 = vcmask 261120
          %v1717 = vsel %vm1715, %v1668, %v1325
          %v1719 = vsel %vm1715, %v1670, %v1327
          %v1721 = vsel %vm1715, %v1672, %v1329
          %v1723 = vsel %vm1715, %v1674, %v1331
          %v1725 = vsel %vm1715, %v1676, %v1333
          %v1727 = vsel %vm1715, %v1678, %v1335
          %v1729 = vsel %vm1715, %v1680, %v1337
          %v1731 = vsel %vm1715, %v1682, %v1339
          %v1733 = vsel %vm1715, %v1684, %v1341
          %v1735 = vsel %vm1715, %v1686, %v1343
          %v1737 = vsel %vm1715, %v1688, %v1345
          %v1739 = vsel %vm1715, %v1690, %v1347
          %v1741 = vsel %vm1715, %v1692, %v1349
          %v1743 = vsel %vm1715, %v1694, %v1351
          %v1745 = vsel %vm1715, %v1696, %v1353
          %v1747 = vsel %vm1715, %v1698, %v1355
          %v1749 = vsel %vm1715, %v1700, %v1357
          %v1751 = vsel %vm1715, %v1702, %v1359
          %v1753 = vsel %vm1715, %v1704, %v1361
          %v1755 = vsel %vm1715, %v1706, %v1363
          %v1757 = vsel %vm1715, %v1708, %v1365
          %v1759 = vsel %vm1715, %v1710, %v1367
          %v1761 = vsel %vm1715, %v1712, %v1369
          %v1763 = vsel %vm1715, %v1714, %v1371
          %v1788 = vunpack.c.l.b16 %v1717
          %v1789 = vunpack.c.h.b16 %v1717
          %v1790 = vunpack.c.l.b16 %v1719
          %v1791 = vunpack.c.h.b16 %v1719
          %v1792 = vunpack.c.l.b16 %v1721
          %v1793 = vunpack.c.h.b16 %v1721
          %v1794 = vunpack.c.l.b16 %v1723
          %v1795 = vunpack.c.h.b16 %v1723
          %v1796 = vunpack.c.l.b16 %v1725
          %v1797 = vunpack.c.h.b16 %v1725
          %v1798 = vunpack.c.l.b16 %v1727
          %v1799 = vunpack.c.h.b16 %v1727
          %v1800 = vunpack.c.l.b16 %v1729
          %v1801 = vunpack.c.h.b16 %v1729
          %v1802 = vunpack.c.l.b16 %v1731
          %v1803 = vunpack.c.h.b16 %v1731
          %v1804 = vunpack.c.l.b16 %v1733
          %v1805 = vunpack.c.h.b16 %v1733
          %v1806 = vunpack.c.l.b16 %v1735
          %v1807 = vunpack.c.h.b16 %v1735
          %v1808 = vunpack.c.l.b16 %v1737
          %v1809 = vunpack.c.h.b16 %v1737
          %v1810 = vunpack.c.l.b16 %v1739
          %v1811 = vunpack.c.h.b16 %v1739
          %v1812 = vunpack.c.l.b16 %v1741
          %v1813 = vunpack.c.h.b16 %v1741
          %v1814 = vunpack.c.l.b16 %v1743
          %v1815 = vunpack.c.h.b16 %v1743
          %v1816 = vunpack.c.l.b16 %v1745
          %v1817 = vunpack.c.h.b16 %v1745
          %v1818 = vunpack.c.l.b16 %v1747
          %v1819 = vunpack.c.h.b16 %v1747
          %v1820 = vunpack.c.l.b16 %v1749
          %v1821 = vunpack.c.h.b16 %v1749
          %v1822 = vunpack.c.l.b16 %v1751
          %v1823 = vunpack.c.h.b16 %v1751
          %v1824 = vunpack.c.l.b16 %v1753
          %v1825 = vunpack.c.h.b16 %v1753
          %v1826 = vunpack.c.l.b16 %v1755
          %v1827 = vunpack.c.h.b16 %v1755
          %v1828 = vunpack.c.l.b16 %v1757
          %v1829 = vunpack.c.h.b16 %v1757
          %v1830 = vunpack.c.l.b16 %v1759
          %v1831 = vunpack.c.h.b16 %v1759
          %v1832 = vunpack.c.l.b16 %v1761
          %v1833 = vunpack.c.h.b16 %v1761
          %v1834 = vunpack.c.l.b16 %v1763
          %v1835 = vunpack.c.h.b16 %v1763
          %v1836 = vpack.c.b16 %v1788, %v1788
          %v1837 = vpack.c.b16 %v1789, %v1789
          %v1838 = vpack.c.b16 %v1790, %v1790
          %v1839 = vpack.c.b16 %v1791, %v1791
          %v1840 = vpack.c.b16 %v1792, %v1792
          %v1841 = vpack.c.b16 %v1793, %v1793
          %v1842 = vpack.c.b16 %v1794, %v1794
          %v1843 = vpack.c.b16 %v1795, %v1795
          %v1844 = vpack.c.b16 %v1796, %v1796
          %v1845 = vpack.c.b16 %v1797, %v1797
          %v1846 = vpack.c.b16 %v1798, %v1798
          %v1847 = vpack.c.b16 %v1799, %v1799
          %v1848 = vpack.c.b16 %v1800, %v1800
          %v1849 = vpack.c.b16 %v1801, %v1801
          %v1850 = vpack.c.b16 %v1802, %v1802
          %v1851 = vpack.c.b16 %v1803, %v1803
          %v1852 = vpack.c.b16 %v1804, %v1804
          %v1853 = vpack.c.b16 %v1805, %v1805
          %v1854 = vpack.c.b16 %v1806, %v1806
          %v1855 = vpack.c.b16 %v1807, %v1807
          %v1856 = vpack.c.b16 %v1808, %v1808
          %v1857 = vpack.c.b16 %v1809, %v1809
          %v1858 = vpack.c.b16 %v1810, %v1810
          %v1859 = vpack.c.b16 %v1811, %v1811
          %v1860 = vpack.c.b16 %v1812, %v1812
          %v1861 = vpack.c.b16 %v1813, %v1813
          %v1862 = vpack.c.b16 %v1814, %v1814
          %v1863 = vpack.c.b16 %v1815, %v1815
          %v1864 = vpack.c.b16 %v1816, %v1816
          %v1865 = vpack.c.b16 %v1817, %v1817
          %v1866 = vpack.c.b16 %v1818, %v1818
          %v1867 = vpack.c.b16 %v1819, %v1819
          %v1868 = vpack.c.b16 %v1820, %v1820
          %v1869 = vpack.c.b16 %v1821, %v1821
          %v1870 = vpack.c.b16 %v1822, %v1822
          %v1871 = vpack.c.b16 %v1823, %v1823
          %v1872 = vpack.c.b16 %v1824, %v1824
          %v1873 = vpack.c.b16 %v1825, %v1825
          %v1874 = vpack.c.b16 %v1826, %v1826
          %v1875 = vpack.c.b16 %v1827, %v1827
          %v1876 = vpack.c.b16 %v1828, %v1828
          %v1877 = vpack.c.b16 %v1829, %v1829
          %v1878 = vpack.c.b16 %v1830, %v1830
          %v1879 = vpack.c.b16 %v1831, %v1831
          %v1880 = vpack.c.b16 %v1832, %v1832
          %v1881 = vpack.c.b16 %v1833, %v1833
          %v1882 = vpack.c.b16 %v1834, %v1834
          %v1883 = vpack.c.b16 %v1835, %v1835
          %vm1932 = vcmask 289792
          %1933 = vst.msk [vmem:[#allocation2] sm:$0xf] %vm1932, %v1836
          %1934 = vst.msk [vmem:[#allocation2 + $0x4] sm:$0xf] %vm1932, %v1837
          %1935 = vst.msk [vmem:[#allocation2 + $0x8] sm:$0xf] %vm1932, %v1838
          %1936 = vst.msk [vmem:[#allocation2 + $0xc] sm:$0xf] %vm1932, %v1839
          %1937 = vst.msk [vmem:[#allocation2 + $0x10] sm:$0xf] %vm1932, %v1840
          %1938 = vst.msk [vmem:[#allocation2 + $0x14] sm:$0xf] %vm1932, %v1841
          %1939 = vst.msk [vmem:[#allocation2 + $0x18] sm:$0xf] %vm1932, %v1842
          %1940 = vst.msk [vmem:[#allocation2 + $0x1c] sm:$0xf] %vm1932, %v1843
          %1941 = vst.msk [vmem:[#allocation2 + $0x20] sm:$0xf] %vm1932, %v1844
          %1942 = vst.msk [vmem:[#allocation2 + $0x24] sm:$0xf] %vm1932, %v1845
          %1943 = vst.msk [vmem:[#allocation2 + $0x28] sm:$0xf] %vm1932, %v1846
          %1944 = vst.msk [vmem:[#allocation2 + $0x2c] sm:$0xf] %vm1932, %v1847
          %1945 = vst.msk [vmem:[#allocation2 + $0x30] sm:$0xf] %vm1932, %v1848
          %1946 = vst.msk [vmem:[#allocation2 + $0x34] sm:$0xf] %vm1932, %v1849
          %1947 = vst.msk [vmem:[#allocation2 + $0x38] sm:$0xf] %vm1932, %v1850
          %1948 = vst.msk [vmem:[#allocation2 + $0x3c] sm:$0xf] %vm1932, %v1851
          %1949 = vst.msk [vmem:[#allocation2 + $0x40] sm:$0xf] %vm1932, %v1852
          %1950 = vst.msk [vmem:[#allocation2 + $0x44] sm:$0xf] %vm1932, %v1853
          %1951 = vst.msk [vmem:[#allocation2 + $0x48] sm:$0xf] %vm1932, %v1854
          %1952 = vst.msk [vmem:[#allocation2 + $0x4c] sm:$0xf] %vm1932, %v1855
          %1953 = vst.msk [vmem:[#allocation2 + $0x50] sm:$0xf] %vm1932, %v1856
          %1954 = vst.msk [vmem:[#allocation2 + $0x54] sm:$0xf] %vm1932, %v1857
          %1955 = vst.msk [vmem:[#allocation2 + $0x58] sm:$0xf] %vm1932, %v1858
          %1956 = vst.msk [vmem:[#allocation2 + $0x5c] sm:$0xf] %vm1932, %v1859
          %1957 = vst.msk [vmem:[#allocation2 + $0x60] sm:$0xf] %vm1932, %v1860
          %1958 = vst.msk [vmem:[#allocation2 + $0x64] sm:$0xf] %vm1932, %v1861
          %1959 = vst.msk [vmem:[#allocation2 + $0x68] sm:$0xf] %vm1932, %v1862
          %1960 = vst.msk [vmem:[#allocation2 + $0x6c] sm:$0xf] %vm1932, %v1863
          %1961 = vst.msk [vmem:[#allocation2 + $0x70] sm:$0xf] %vm1932, %v1864
          %1962 = vst.msk [vmem:[#allocation2 + $0x74] sm:$0xf] %vm1932, %v1865
          %1963 = vst.msk [vmem:[#allocation2 + $0x78] sm:$0xf] %vm1932, %v1866
          %1964 = vst.msk [vmem:[#allocation2 + $0x7c] sm:$0xf] %vm1932, %v1867
          %1965 = vst.msk [vmem:[#allocation2 + $0x80] sm:$0xf] %vm1932, %v1868
          %1966 = vst.msk [vmem:[#allocation2 + $0x84] sm:$0xf] %vm1932, %v1869
          %1967 = vst.msk [vmem:[#allocation2 + $0x88] sm:$0xf] %vm1932, %v1870
          %1968 = vst.msk [vmem:[#allocation2 + $0x8c] sm:$0xf] %vm1932, %v1871
          %1969 = vst.msk [vmem:[#allocation2 + $0x90] sm:$0xf] %vm1932, %v1872
          %1970 = vst.msk [vmem:[#allocation2 + $0x94] sm:$0xf] %vm1932, %v1873
          %1971 = vst.msk [vmem:[#allocation2 + $0x98] sm:$0xf] %vm1932, %v1874
          %1972 = vst.msk [vmem:[#allocation2 + $0x9c] sm:$0xf] %vm1932, %v1875
          %1973 = vst.msk [vmem:[#allocation2 + $0xa0] sm:$0xf] %vm1932, %v1876
          %1974 = vst.msk [vmem:[#allocation2 + $0xa4] sm:$0xf] %vm1932, %v1877
          %1975 = vst.msk [vmem:[#allocation2 + $0xa8] sm:$0xf] %vm1932, %v1878
          %1976 = vst.msk [vmem:[#allocation2 + $0xac] sm:$0xf] %vm1932, %v1879
          %1977 = vst.msk [vmem:[#allocation2 + $0xb0] sm:$0xf] %vm1932, %v1880
          %1978 = vst.msk [vmem:[#allocation2 + $0xb4] sm:$0xf] %vm1932, %v1881
          %1979 = vst.msk [vmem:[#allocation2 + $0xb8] sm:$0xf] %vm1932, %v1882
          %1980 = vst.msk [vmem:[#allocation2 + $0xbc] sm:$0xf] %vm1932, %v1883
        $region40: #{tpu_custom_call.1} parent=35 // pred_fallthru
          _
        %v1981 = vld [vmem:[#allocation2] sm:$0xf]
        %v1982 = vld [vmem:[#allocation2 + $0x4] sm:$0xf]
        %v1983 = vld [vmem:[#allocation2 + $0x8] sm:$0xf]
        %v1984 = vld [vmem:[#allocation2 + $0xc] sm:$0xf]
        %v1985 = vld [vmem:[#allocation2 + $0x10] sm:$0xf]
        %v1986 = vld [vmem:[#allocation2 + $0x14] sm:$0xf]
        %v1987 = vld [vmem:[#allocation2 + $0x18] sm:$0xf]
        %v1988 = vld [vmem:[#allocation2 + $0x1c] sm:$0xf]
        %v1989 = vld [vmem:[#allocation2 + $0x20] sm:$0xf]
        %v1990 = vld [vmem:[#allocation2 + $0x24] sm:$0xf]
        %v1991 = vld [vmem:[#allocation2 + $0x28] sm:$0xf]
        %v1992 = vld [vmem:[#allocation2 + $0x2c] sm:$0xf]
        %v1993 = vld [vmem:[#allocation2 + $0x30] sm:$0xf]
        %v1994 = vld [vmem:[#allocation2 + $0x34] sm:$0xf]
        %v1995 = vld [vmem:[#allocation2 + $0x38] sm:$0xf]
        %v1996 = vld [vmem:[#allocation2 + $0x3c] sm:$0xf]
        %v1997 = vld [vmem:[#allocation2 + $0x40] sm:$0xf]
        %v1998 = vld [vmem:[#allocation2 + $0x44] sm:$0xf]
        %v1999 = vld [vmem:[#allocation2 + $0x48] sm:$0xf]
        %v2000 = vld [vmem:[#allocation2 + $0x4c] sm:$0xf]
        %v2001 = vld [vmem:[#allocation2 + $0x50] sm:$0xf]
        %v2002 = vld [vmem:[#allocation2 + $0x54] sm:$0xf]
        %v2003 = vld [vmem:[#allocation2 + $0x58] sm:$0xf]
        %v2004 = vld [vmem:[#allocation2 + $0x5c] sm:$0xf]
        %v2005 = vld [vmem:[#allocation2 + $0x60] sm:$0xf]
        %v2006 = vld [vmem:[#allocation2 + $0x64] sm:$0xf]
        %v2007 = vld [vmem:[#allocation2 + $0x68] sm:$0xf]
        %v2008 = vld [vmem:[#allocation2 + $0x6c] sm:$0xf]
        %v2009 = vld [vmem:[#allocation2 + $0x70] sm:$0xf]
        %v2010 = vld [vmem:[#allocation2 + $0x74] sm:$0xf]
        %v2011 = vld [vmem:[#allocation2 + $0x78] sm:$0xf]
        %v2012 = vld [vmem:[#allocation2 + $0x7c] sm:$0xf]
        %v2013 = vld [vmem:[#allocation2 + $0x80] sm:$0xf]
        %v2014 = vld [vmem:[#allocation2 + $0x84] sm:$0xf]
        %v2015 = vld [vmem:[#allocation2 + $0x88] sm:$0xf]
        %v2016 = vld [vmem:[#allocation2 + $0x8c] sm:$0xf]
        %v2017 = vld [vmem:[#allocation2 + $0x90] sm:$0xf]
        %v2018 = vld [vmem:[#allocation2 + $0x94] sm:$0xf]
        %v2019 = vld [vmem:[#allocation2 + $0x98] sm:$0xf]
        %v2020 = vld [vmem:[#allocation2 + $0x9c] sm:$0xf]
        %v2021 = vld [vmem:[#allocation2 + $0xa0] sm:$0xf]
        %v2022 = vld [vmem:[#allocation2 + $0xa4] sm:$0xf]
        %v2023 = vld [vmem:[#allocation2 + $0xa8] sm:$0xf]
        %v2024 = vld [vmem:[#allocation2 + $0xac] sm:$0xf]
        %v2025 = vld [vmem:[#allocation2 + $0xb0] sm:$0xf]
        %v2026 = vld [vmem:[#allocation2 + $0xb4] sm:$0xf]
        %v2027 = vld [vmem:[#allocation2 + $0xb8] sm:$0xf]
        %v2028 = vld [vmem:[#allocation2 + $0xbc] sm:$0xf]
        %v2029 = vld [vmem:[%s305] sm:$0xf]
        %v2030 = vld [vmem:[%s305 + $0x4] sm:$0xf]
        %v2031 = vld [vmem:[%s305 + $0x8] sm:$0xf]
        %v2032 = vld [vmem:[%s305 + $0xc] sm:$0xf]
        %v2033 = vld [vmem:[%s305 + $0x10] sm:$0x3]
        %v2034 = vld [vmem:[%s308] sm:$0x1]
        %v2036 = vlaneseq
        %v2037 = vshrl.u32 %v2036, 7
        %v2038 = vsub.s32 0, %v2037
        %v2039 = vrot.slane %v2034, %v2038
        %v2089 = vunpack.c.l.b16 %v1981
        %v2090 = vunpack.c.l.b16 %v1982
        %v2091 = vunpack.c.l.b16 %v1983
        %v2092 = vunpack.c.l.b16 %v1984
        %v2093 = vunpack.c.l.b16 %v1985
        %v2094 = vunpack.c.l.b16 %v1986
        %v2095 = vunpack.c.l.b16 %v1987
        %v2096 = vunpack.c.l.b16 %v1988
        %v2097 = vunpack.c.l.b16 %v1989
        %v2098 = vunpack.c.l.b16 %v1990
        %v2099 = vunpack.c.l.b16 %v1991
        %v2100 = vunpack.c.l.b16 %v1992
        %v2101 = vunpack.c.l.b16 %v1993
        %v2102 = vunpack.c.l.b16 %v1994
        %v2103 = vunpack.c.l.b16 %v1995
        %v2104 = vunpack.c.l.b16 %v1996
        %v2105 = vunpack.c.l.b16 %v1997
        %v2106 = vunpack.c.l.b16 %v1998
        %v2107 = vunpack.c.l.b16 %v1999
        %v2108 = vunpack.c.l.b16 %v2000
        %v2109 = vunpack.c.l.b16 %v2001
        %v2110 = vunpack.c.l.b16 %v2002
        %v2111 = vunpack.c.l.b16 %v2003
        %v2112 = vunpack.c.l.b16 %v2004
        %v2113 = vunpack.c.l.b16 %v2005
        %v2114 = vunpack.c.l.b16 %v2006
        %v2115 = vunpack.c.l.b16 %v2007
        %v2116 = vunpack.c.l.b16 %v2008
        %v2117 = vunpack.c.l.b16 %v2009
        %v2118 = vunpack.c.l.b16 %v2010
        %v2119 = vunpack.c.l.b16 %v2011
        %v2120 = vunpack.c.l.b16 %v2012
        %v2121 = vunpack.c.l.b16 %v2013
        %v2122 = vunpack.c.l.b16 %v2014
        %v2123 = vunpack.c.l.b16 %v2015
        %v2124 = vunpack.c.l.b16 %v2016
        %v2125 = vunpack.c.l.b16 %v2017
        %v2126 = vunpack.c.l.b16 %v2018
        %v2127 = vunpack.c.l.b16 %v2019
        %v2128 = vunpack.c.l.b16 %v2020
        %v2129 = vunpack.c.l.b16 %v2021
        %v2130 = vunpack.c.l.b16 %v2022
        %v2131 = vunpack.c.l.b16 %v2023
        %v2132 = vunpack.c.l.b16 %v2024
        %v2133 = vunpack.c.l.b16 %v2025
        %v2134 = vunpack.c.l.b16 %v2026
        %v2135 = vunpack.c.l.b16 %v2027
        %v2136 = vunpack.c.l.b16 %v2028
        %v2137 = vpack.c.b16 %v2090, %v2089
        %v2138 = vpack.c.b16 %v2092, %v2091
        %v2139 = vpack.c.b16 %v2094, %v2093
        %v2140 = vpack.c.b16 %v2096, %v2095
        %v2141 = vpack.c.b16 %v2098, %v2097
        %v2142 = vpack.c.b16 %v2100, %v2099
        %v2143 = vpack.c.b16 %v2102, %v2101
        %v2144 = vpack.c.b16 %v2104, %v2103
        %v2145 = vpack.c.b16 %v2106, %v2105
        %v2146 = vpack.c.b16 %v2108, %v2107
        %v2147 = vpack.c.b16 %v2110, %v2109
        %v2148 = vpack.c.b16 %v2112, %v2111
        %v2149 = vpack.c.b16 %v2114, %v2113
        %v2150 = vpack.c.b16 %v2116, %v2115
        %v2151 = vpack.c.b16 %v2118, %v2117
        %v2152 = vpack.c.b16 %v2120, %v2119
        %v2153 = vpack.c.b16 %v2122, %v2121
        %v2154 = vpack.c.b16 %v2124, %v2123
        %v2155 = vpack.c.b16 %v2126, %v2125
        %v2156 = vpack.c.b16 %v2128, %v2127
        %v2157 = vpack.c.b16 %v2130, %v2129
        %v2158 = vpack.c.b16 %v2132, %v2131
        %v2159 = vpack.c.b16 %v2134, %v2133
        %v2160 = vpack.c.b16 %v2136, %v2135
        %v2166 = vunpack.c.l.b16 %v2029
        %v2167 = vunpack.c.l.b16 %v2030
        %v2168 = vunpack.c.l.b16 %v2031
        %v2169 = vunpack.c.l.b16 %v2032
        %v2170 = vunpack.c.l.b16 %v2033
        %v2171 = vpack.c.b16 %v2167, %v2166
        %v2172 = vpack.c.b16 %v2169, %v2168
        %v2173 = vpack.c.b16 %v2170, %v2170
        %vm2176 = vcmask 293888
        %v2178 = vsel %vm2176, %v2137, 0
        %v2181 = vsel %vm2176, %v2138, 0
        %v2184 = vsel %vm2176, %v2139, 0
        %v2187 = vsel %vm2176, %v2140, 0
        %v2190 = vsel %vm2176, %v2141, 0
        %v2193 = vsel %vm2176, %v2142, 0
        %v2196 = vsel %vm2176, %v2143, 0
        %v2199 = vsel %vm2176, %v2144, 0
        %v2202 = vsel %vm2176, %v2145, 0
        %v2205 = vsel %vm2176, %v2146, 0
        %v2208 = vsel %vm2176, %v2147, 0
        %v2211 = vsel %vm2176, %v2148, 0
        %v2214 = vsel %vm2176, %v2149, 0
        %v2217 = vsel %vm2176, %v2150, 0
        %v2220 = vsel %vm2176, %v2151, 0
        %v2223 = vsel %vm2176, %v2152, 0
        %v2226 = vsel %vm2176, %v2153, 0
        %v2229 = vsel %vm2176, %v2154, 0
        %v2232 = vsel %vm2176, %v2155, 0
        %v2235 = vsel %vm2176, %v2156, 0
        %v2238 = vsel %vm2176, %v2157, 0
        %v2241 = vsel %vm2176, %v2158, 0
        %v2244 = vsel %vm2176, %v2159, 0
        %v2247 = vsel %vm2176, %v2160, 0
        %vm2249 = vcmask 1041408
        %v2251 = vsel %vm2249, %v2173, 0
        %2253 = vmatprep.subr.bf16.mxu0 0
        %2254 = vmatpush1.bf16.msra.mxu0 0
        %2255 = vmatprep.subr.bf16.mxu0 0
        %2256 = vmatpush1.bf16.msra.mxu0 0
        %2257 = vmatprep.subr.bf16.mxu0 0
        %2258 = vmatpush1.bf16.msra.mxu0 0
        %2259 = vmatprep.subr.bf16.mxu0 0
        %2260 = vmatpush1.bf16.msra.mxu0 0
        %2261 = vmatprep.subr.bf16.mxu0 0
        %2262 = vmatpush1.bf16.msra.mxu0 0
        %2263 = vmatprep.subr.bf16.mxu0 0
        %2264 = vmatpush1.bf16.msra.mxu0 %v2251
        %2265 = vmatprep.subr.bf16.mxu0 0
        %2266 = vmatpush1.bf16.msra.mxu0 %v2172
        %2267 = vmatprep.subr.bf16.mxu0 0
        %2268 = vmatpush1.bf16.msra.mxu0 %v2171
        %2269 = vmatprep.subr.bf16.mxu0 0
        %2270 = vmatpush2.bf16.msra.mxu0 0
        %2271 = vmatprep.subr.bf16.mxu0 0
        %2272 = vmatpush2.bf16.msra.mxu0 0
        %2273 = vmatprep.subr.bf16.mxu0 0
        %2274 = vmatpush2.bf16.msra.mxu0 0
        %2275 = vmatprep.subr.bf16.mxu0 0
        %2276 = vmatpush2.bf16.msra.mxu0 0
        %2277 = vmatprep.subr.bf16.mxu0 0
        %2278 = vmatpush2.bf16.msra.mxu0 0
        %2279 = vmatprep.subr.bf16.mxu0 0
        %2280 = vmatpush2.bf16.msra.mxu0 0
        %2281 = vmatprep.subr.bf16.mxu0 0
        %2282 = vmatpush2.bf16.msra.mxu0 0
        %2283 = vmatprep.subr.bf16.mxu0 0
        %2284 = vmatpush2.bf16.msra.mxu0 0
        %2285 = vmatprep.mubr.bf16.mxu0 0
        %2286 = vmatmul.mubr.bf16.gmra.mxu0 %v2178
        %v2287 = vpop.f32.mrf.mxu0
        %v2288 = vadd.f32 %v2039, %v2287
        %v2289 = vpop.f32.mrf.mxu0
        %v2290 = vpop.f32.mrf.mxu0
        %v2291 = vadd.f32 %v2039, %v2290
        %v2292 = vpop.f32.mrf.mxu0
        %2293 = vmatprep.mubr.bf16.mxu0 0
        %2294 = vmatmul.mubr.bf16.gmra.mxu0 %v2181
        %v2295 = vpop.f32.mrf.mxu0
        %v2296 = vadd.f32 %v2039, %v2295
        %v2297 = vpop.f32.mrf.mxu0
        %v2298 = vpop.f32.mrf.mxu0
        %v2299 = vadd.f32 %v2039, %v2298
        %v2300 = vpop.f32.mrf.mxu0
        %2301 = vmatprep.mubr.bf16.mxu0 0
        %2302 = vmatmul.mubr.bf16.gmra.mxu0 %v2184
        %v2303 = vpop.f32.mrf.mxu0
        %v2304 = vadd.f32 %v2039, %v2303
        %v2305 = vpop.f32.mrf.mxu0
        %v2306 = vpop.f32.mrf.mxu0
        %v2307 = vadd.f32 %v2039, %v2306
        %v2308 = vpop.f32.mrf.mxu0
        %2309 = vmatprep.mubr.bf16.mxu0 0
        %2310 = vmatmul.mubr.bf16.gmra.mxu0 %v2187
        %v2311 = vpop.f32.mrf.mxu0
        %v2312 = vadd.f32 %v2039, %v2311
        %v2313 = vpop.f32.mrf.mxu0
        %v2314 = vpop.f32.mrf.mxu0
        %v2315 = vadd.f32 %v2039, %v2314
        %v2316 = vpop.f32.mrf.mxu0
        %2317 = vmatprep.mubr.bf16.mxu0 0
        %2318 = vmatmul.mubr.bf16.gmra.mxu0 %v2190
        %v2319 = vpop.f32.mrf.mxu0
        %v2320 = vadd.f32 %v2039, %v2319
        %v2321 = vpop.f32.mrf.mxu0
        %v2322 = vpop.f32.mrf.mxu0
        %v2323 = vadd.f32 %v2039, %v2322
        %v2324 = vpop.f32.mrf.mxu0
        %2325 = vmatprep.mubr.bf16.mxu0 0
        %2326 = vmatmul.mubr.bf16.gmra.mxu0 %v2193
        %v2327 = vpop.f32.mrf.mxu0
        %v2328 = vadd.f32 %v2039, %v2327
        %v2329 = vpop.f32.mrf.mxu0
        %v2330 = vpop.f32.mrf.mxu0
        %v2331 = vadd.f32 %v2039, %v2330
        %v2332 = vpop.f32.mrf.mxu0
        %2333 = vmatprep.mubr.bf16.mxu0 0
        %2334 = vmatmul.mubr.bf16.gmra.mxu0 %v2196
        %v2335 = vpop.f32.mrf.mxu0
        %v2336 = vadd.f32 %v2039, %v2335
        %v2337 = vpop.f32.mrf.mxu0
        %v2338 = vpop.f32.mrf.mxu0
        %v2339 = vadd.f32 %v2039, %v2338
        %v2340 = vpop.f32.mrf.mxu0
        %2341 = vmatprep.mubr.bf16.mxu0 0
        %2342 = vmatmul.mubr.bf16.gmra.mxu0 %v2199
        %v2343 = vpop.f32.mrf.mxu0
        %v2344 = vadd.f32 %v2039, %v2343
        %v2345 = vpop.f32.mrf.mxu0
        %v2346 = vpop.f32.mrf.mxu0
        %v2347 = vadd.f32 %v2039, %v2346
        %v2348 = vpop.f32.mrf.mxu0
        %2349 = vmatprep.mubr.bf16.mxu0 0
        %2350 = vmatmul.mubr.bf16.gmra.mxu0 %v2202
        %v2351 = vpop.f32.mrf.mxu0
        %v2352 = vadd.f32 %v2039, %v2351
        %v2353 = vpop.f32.mrf.mxu0
        %v2354 = vpop.f32.mrf.mxu0
        %v2355 = vadd.f32 %v2039, %v2354
        %v2356 = vpop.f32.mrf.mxu0
        %2357 = vmatprep.mubr.bf16.mxu0 0
        %2358 = vmatmul.mubr.bf16.gmra.mxu0 %v2205
        %v2359 = vpop.f32.mrf.mxu0
        %v2360 = vadd.f32 %v2039, %v2359
        %v2361 = vpop.f32.mrf.mxu0
        %v2362 = vpop.f32.mrf.mxu0
        %v2363 = vadd.f32 %v2039, %v2362
        %v2364 = vpop.f32.mrf.mxu0
        %2365 = vmatprep.mubr.bf16.mxu0 0
        %2366 = vmatmul.mubr.bf16.gmra.mxu0 %v2208
        %v2367 = vpop.f32.mrf.mxu0
        %v2368 = vadd.f32 %v2039, %v2367
        %v2369 = vpop.f32.mrf.mxu0
        %v2370 = vpop.f32.mrf.mxu0
        %v2371 = vadd.f32 %v2039, %v2370
        %v2372 = vpop.f32.mrf.mxu0
        %2373 = vmatprep.mubr.bf16.mxu0 0
        %2374 = vmatmul.mubr.bf16.gmra.mxu0 %v2211
        %v2375 = vpop.f32.mrf.mxu0
        %v2376 = vadd.f32 %v2039, %v2375
        %v2377 = vpop.f32.mrf.mxu0
        %v2378 = vpop.f32.mrf.mxu0
        %v2379 = vadd.f32 %v2039, %v2378
        %v2380 = vpop.f32.mrf.mxu0
        %2381 = vmatprep.mubr.bf16.mxu0 0
        %2382 = vmatmul.mubr.bf16.gmra.mxu0 %v2214
        %v2383 = vpop.f32.mrf.mxu0
        %v2384 = vadd.f32 %v2039, %v2383
        %v2385 = vpop.f32.mrf.mxu0
        %v2386 = vpop.f32.mrf.mxu0
        %v2387 = vadd.f32 %v2039, %v2386
        %v2388 = vpop.f32.mrf.mxu0
        %2389 = vmatprep.mubr.bf16.mxu0 0
        %2390 = vmatmul.mubr.bf16.gmra.mxu0 %v2217
        %v2391 = vpop.f32.mrf.mxu0
        %v2392 = vadd.f32 %v2039, %v2391
        %v2393 = vpop.f32.mrf.mxu0
        %v2394 = vpop.f32.mrf.mxu0
        %v2395 = vadd.f32 %v2039, %v2394
        %v2396 = vpop.f32.mrf.mxu0
        %2397 = vmatprep.mubr.bf16.mxu0 0
        %2398 = vmatmul.mubr.bf16.gmra.mxu0 %v2220
        %v2399 = vpop.f32.mrf.mxu0
        %v2400 = vadd.f32 %v2039, %v2399
        %v2401 = vpop.f32.mrf.mxu0
        %v2402 = vpop.f32.mrf.mxu0
        %v2403 = vadd.f32 %v2039, %v2402
        %v2404 = vpop.f32.mrf.mxu0
        %2405 = vmatprep.mubr.bf16.mxu0 0
        %2406 = vmatmul.mubr.bf16.gmra.mxu0 %v2223
        %v2407 = vpop.f32.mrf.mxu0
        %v2408 = vadd.f32 %v2039, %v2407
        %v2409 = vpop.f32.mrf.mxu0
        %v2410 = vpop.f32.mrf.mxu0
        %v2411 = vadd.f32 %v2039, %v2410
        %v2412 = vpop.f32.mrf.mxu0
        %2413 = vmatprep.mubr.bf16.mxu0 0
        %2414 = vmatmul.mubr.bf16.gmra.mxu0 %v2226
        %v2415 = vpop.f32.mrf.mxu0
        %v2416 = vadd.f32 %v2039, %v2415
        %v2417 = vpop.f32.mrf.mxu0
        %v2418 = vpop.f32.mrf.mxu0
        %v2419 = vadd.f32 %v2039, %v2418
        %v2420 = vpop.f32.mrf.mxu0
        %2421 = vmatprep.mubr.bf16.mxu0 0
        %2422 = vmatmul.mubr.bf16.gmra.mxu0 %v2229
        %v2423 = vpop.f32.mrf.mxu0
        %v2424 = vadd.f32 %v2039, %v2423
        %v2425 = vpop.f32.mrf.mxu0
        %v2426 = vpop.f32.mrf.mxu0
        %v2427 = vadd.f32 %v2039, %v2426
        %v2428 = vpop.f32.mrf.mxu0
        %2429 = vmatprep.mubr.bf16.mxu0 0
        %2430 = vmatmul.mubr.bf16.gmra.mxu0 %v2232
        %v2431 = vpop.f32.mrf.mxu0
        %v2432 = vadd.f32 %v2039, %v2431
        %v2433 = vpop.f32.mrf.mxu0
        %v2434 = vpop.f32.mrf.mxu0
        %v2435 = vadd.f32 %v2039, %v2434
        %v2436 = vpop.f32.mrf.mxu0
        %2437 = vmatprep.mubr.bf16.mxu0 0
        %2438 = vmatmul.mubr.bf16.gmra.mxu0 %v2235
        %v2439 = vpop.f32.mrf.mxu0
        %v2440 = vadd.f32 %v2039, %v2439
        %v2441 = vpop.f32.mrf.mxu0
        %v2442 = vpop.f32.mrf.mxu0
        %v2443 = vadd.f32 %v2039, %v2442
        %v2444 = vpop.f32.mrf.mxu0
        %2445 = vmatprep.mubr.bf16.mxu0 0
        %2446 = vmatmul.mubr.bf16.gmra.mxu0 %v2238
        %v2447 = vpop.f32.mrf.mxu0
        %v2448 = vadd.f32 %v2039, %v2447
        %v2449 = vpop.f32.mrf.mxu0
        %v2450 = vpop.f32.mrf.mxu0
        %v2451 = vadd.f32 %v2039, %v2450
        %v2452 = vpop.f32.mrf.mxu0
        %2453 = vmatprep.mubr.bf16.mxu0 0
        %2454 = vmatmul.mubr.bf16.gmra.mxu0 %v2241
        %v2455 = vpop.f32.mrf.mxu0
        %v2456 = vadd.f32 %v2039, %v2455
        %v2457 = vpop.f32.mrf.mxu0
        %v2458 = vpop.f32.mrf.mxu0
        %v2459 = vadd.f32 %v2039, %v2458
        %v2460 = vpop.f32.mrf.mxu0
        %2461 = vmatprep.mubr.bf16.mxu0 0
        %2462 = vmatmul.mubr.bf16.gmra.mxu0 %v2244
        %v2463 = vpop.f32.mrf.mxu0
        %v2464 = vadd.f32 %v2039, %v2463
        %v2465 = vpop.f32.mrf.mxu0
        %v2466 = vpop.f32.mrf.mxu0
        %v2467 = vadd.f32 %v2039, %v2466
        %v2468 = vpop.f32.mrf.mxu0
        %2469 = vmatprep.mubr.bf16.mxu0 0
        %2470 = vmatmul.mubr.bf16.gmra.mxu0 %v2247
        %v2471 = vpop.f32.mrf.mxu0
        %v2472 = vadd.f32 %v2039, %v2471
        %v2473 = vpop.f32.mrf.mxu0
        %v2474 = vpop.f32.mrf.mxu0
        %v2475 = vadd.f32 %v2039, %v2474
        %v2476 = vpop.f32.mrf.mxu0
        %2477 = vdwg.mxu0
        %2478 = vst [vmem:[%s279] sm:$0xff] %v2288
        %2479 = vst [vmem:[%s279 + $0x8] sm:$0xff] %v2291
        %2480 = vst [vmem:[%s279 + $0x10] sm:$0xff] %v2296
        %2481 = vst [vmem:[%s279 + $0x18] sm:$0xff] %v2299
        %2482 = vst [vmem:[%s279 + $0x20] sm:$0xff] %v2304
        %2483 = vst [vmem:[%s279 + $0x28] sm:$0xff] %v2307
        %2484 = vst [vmem:[%s279 + $0x30] sm:$0xff] %v2312
        %2485 = vst [vmem:[%s279 + $0x38] sm:$0xff] %v2315
        %2486 = vst [vmem:[%s279 + $0x40] sm:$0xff] %v2320
        %2487 = vst [vmem:[%s279 + $0x48] sm:$0xff] %v2323
        %2488 = vst [vmem:[%s279 + $0x50] sm:$0xff] %v2328
        %2489 = vst [vmem:[%s279 + $0x58] sm:$0xff] %v2331
        %2490 = vst [vmem:[%s279 + $0x60] sm:$0xff] %v2336
        %2491 = vst [vmem:[%s279 + $0x68] sm:$0xff] %v2339
        %2492 = vst [vmem:[%s279 + $0x70] sm:$0xff] %v2344
        %2493 = vst [vmem:[%s279 + $0x78] sm:$0xff] %v2347
        %2494 = vst [vmem:[%s279 + $0x80] sm:$0xff] %v2352
        %2495 = vst [vmem:[%s279 + $0x88] sm:$0xff] %v2355
        %2496 = vst [vmem:[%s279 + $0x90] sm:$0xff] %v2360
        %2497 = vst [vmem:[%s279 + $0x98] sm:$0xff] %v2363
        %2498 = vst [vmem:[%s279 + $0xa0] sm:$0xff] %v2368
        %2499 = vst [vmem:[%s279 + $0xa8] sm:$0xff] %v2371
        %2500 = vst [vmem:[%s279 + $0xb0] sm:$0xff] %v2376
        %2501 = vst [vmem:[%s279 + $0xb8] sm:$0xff] %v2379
        %2502 = vst [vmem:[%s279 + $0xc0] sm:$0xff] %v2384
        %2503 = vst [vmem:[%s279 + $0xc8] sm:$0xff] %v2387
        %2504 = vst [vmem:[%s279 + $0xd0] sm:$0xff] %v2392
        %2505 = vst [vmem:[%s279 + $0xd8] sm:$0xff] %v2395
        %2506 = vst [vmem:[%s279 + $0xe0] sm:$0xff] %v2400
        %2507 = vst [vmem:[%s279 + $0xe8] sm:$0xff] %v2403
        %2508 = vst [vmem:[%s279 + $0xf0] sm:$0xff] %v2408
        %2509 = vst [vmem:[%s279 + $0xf8] sm:$0xff] %v2411
        %2510 = vst [vmem:[%s279 + $0x100] sm:$0xff] %v2416
        %2511 = vst [vmem:[%s279 + $0x108] sm:$0xff] %v2419
        %2512 = vst [vmem:[%s279 + $0x110] sm:$0xff] %v2424
        %2513 = vst [vmem:[%s279 + $0x118] sm:$0xff] %v2427
        %2514 = vst [vmem:[%s279 + $0x120] sm:$0xff] %v2432
        %2515 = vst [vmem:[%s279 + $0x128] sm:$0xff] %v2435
        %2516 = vst [vmem:[%s279 + $0x130] sm:$0xff] %v2440
        %2517 = vst [vmem:[%s279 + $0x138] sm:$0xff] %v2443
        %2518 = vst [vmem:[%s279 + $0x140] sm:$0xff] %v2448
        %2519 = vst [vmem:[%s279 + $0x148] sm:$0xff] %v2451
        %2520 = vst [vmem:[%s279 + $0x150] sm:$0xff] %v2456
        %2521 = vst [vmem:[%s279 + $0x158] sm:$0xff] %v2459
        %2522 = vst [vmem:[%s279 + $0x160] sm:$0xff] %v2464
        %2523 = vst [vmem:[%s279 + $0x168] sm:$0xff] %v2467
        %2524 = vst [vmem:[%s279 + $0x170] sm:$0xff] %v2472
        %2525 = vst [vmem:[%s279 + $0x178] sm:$0xff] %v2475
        %s2526 = sand.u32 %s159, 1
        %s2527 = scalar_lea.sflag [#allocation4], %s2526
        %s2528 = sand.u32 %s159, 1
        %s2529 = smul.addr %s2528, 384
        %s2530 = scalar_lea.vmem [#allocation3], %s2529
        // Predicated region
        $region41: #{tpu_custom_call.1} parent=35 // pred_check
          %p2531 = pneg %p169
        $region42: #{tpu_custom_call.1} parent=35 // pred_check_branch
          %2533 = sbr.rel (%p2531) target = $region44
        $region43: #{tpu_custom_call.1} parent=35 // pred_region
          %s2534 = smul.u32 48, %s24
          %s2536 = ssub.s32 6144, 6144
          %2537 = vsyncadd %s2527, %s2536
          %s2538 = sadd.s32 %s25, %s2534
          %s2539 = smul.addr %s23, 48
          %s2540 = sadd.s32 %s2538, %s2539
          %s2541 = smul.addr %s2540, 128
          %s2542 = scalar_lea.hbm %s4, %s2541
          %s2543 = sshll.u32 %s2530, 4
          %s2544 = int_to_ptr.vmem [resolvable:$true] %s2543
          %2549 = dma.vmem_to_hbm [thread:$0]  %s2544, 6144, %s2542, %s2527, 128, 128, 8
        $region44: #{tpu_custom_call.1} parent=35 // pred_fallthru
          _
      $region36: #{tpu_custom_call.1} parent=5 // pred_fallthru
        _
      %p2550 = scmp.le.s32.totalorder 2, %s13
      // Predicated region
      $region45: #{tpu_custom_call.1} parent=5 // pred_check
        %p2551 = pneg %p2550
      $region46: #{tpu_custom_call.1} parent=5 // pred_check_branch
        %2553 = sbr.rel (%p2551) target = $region48
      $region47: #{tpu_custom_call.1} parent=5 // pred_region
        %s2554 = ssub.s32 %s13, 2
        // Predicated region
        $region49: #{tpu_custom_call.1} parent=47 // pred_check
          %p2555 = pneg %p175
        $region50: #{tpu_custom_call.1} parent=47 // pred_check_branch
          %2557 = sbr.rel (%p2555) target = $region52
        $region51: #{tpu_custom_call.1} parent=47 // pred_region
          %s2558 = sand.u32 %s160, 1
          %s2559 = scalar_lea.sflag [#allocation4], %s2558
          %s2560 = sand.u32 %s160, 1
          %s2561 = smul.addr %s2560, 384
          %s2562 = scalar_lea.vmem [#allocation3], %s2561
          %2563 = dma.done %s2559, 6144
        $region52: #{tpu_custom_call.1} parent=47 // pred_fallthru
          _
      $region48: #{tpu_custom_call.1} parent=5 // pred_fallthru
        _
    $region6: #{tpu_custom_call.1} parent=1 // loop_footer
      %s17 = sadd.s32 1, %s13
    $region7: #{tpu_custom_call.1} parent=1 // loop_footer_branch
      %12 = sbr.rel target = $region3
    $region8: #{tpu_custom_call.1} parent=1 // loop_exit
      _
    %2564 = vsyncpa [#allocation4], 1
    %s2565 = scalar_lea.sflag [#allocation4], 1
    %2566 = vsyncpa %s2565, 1

</llo_original>
